<compile_context>
chip_gen: v7x
topology: tpu7x:2x2x1
jax: 0.10.0
libtpu: 0.0.40
codegen_flags: <defaults>
</compile_context>

<pallas_src>
import numpy as np

import jax
import jax.numpy as jnp
from jax import lax
from jax.experimental import pallas as pl
from jax.experimental.pallas import tpu as pltpu


# ------------------------------- Pallas kernel -------------------------------

def fused_upsample_doubleconv(x2d, wwk, whb, a1k, b1t, a2k, b2t, *, hout):
    """x2d: (B*H, W*Cin) bf16 -> (B*Hout, Wout*Cout) f32, fully fused, one grid step."""
    BHout = whb.shape[0]
    NCout = a2k.shape[1]

    def kernel(x_ref, wwk_ref, whb_ref, a1_ref, b1_ref, a2_ref, b2_ref, o_ref):
        f32, bf16 = jnp.float32, jnp.bfloat16

        # Bilinear x2 upsample (align_corners=True), separable -> two bf16 MXU matmuls:
        #   width interp along the lane axis (kron with I_Cin),
        #   height interp along the sublane axis (block-diagonal over the batch).
        xw = jnp.dot(x_ref[...], wwk_ref[...],
                     preferred_element_type=f32)                       # (B*H,    Wout*Cin)
        up = jnp.dot(whb_ref[...], xw.astype(bf16),
                     preferred_element_type=f32)                       # (B*Hout, Wout*Cin)

        def conv_bn_relu(inp, a_ref, b_ref):
            # 3x3 conv + folded BN + ReLU as ONE matmul:
            #  - width taps + width zero-padding are baked into the banded weight matrix,
            #  - height taps come from pltpu.roll (XLU) + image/batch-edge masking (VPU),
            #    folded into K by concatenating the three shifted slabs along lanes.
            m = inp.shape[0]
            h = lax.broadcasted_iota(jnp.int32, inp.shape, 0) % hout   # row index within image
            top = jnp.where(h == 0, 0.0, pltpu.roll(inp, shift=1, axis=0))        # inp[h-1]
            bot = jnp.where(h == hout - 1, 0.0,
                            pltpu.roll(inp, shift=m - 1, axis=0))                 # inp[h+1]
            lhs = jnp.concatenate([top, inp, bot], axis=1).astype(bf16)  # (M, 3*N_in)
            acc = jnp.dot(lhs, a_ref[...], preferred_element_type=f32)
            return jnp.maximum(acc + b_ref[...], 0.0)

        y1 = conv_bn_relu(up, a1_ref, b1_ref)      # (B*Hout, Wout*Cmid)
        y2 = conv_bn_relu(y1, a2_ref, b2_ref)      # (B*Hout, Wout*Cout)
        o_ref[...] = y2.astype(o_ref.dtype)

    return pl.pallas_call(
        kernel,
        out_shape=jax.ShapeDtypeStruct((BHout, NCout), jnp.float32),
        grid=(1,),
        in_specs=[
            pl.BlockSpec(x2d.shape, lambda i: (0, 0)),
            pl.BlockSpec(wwk.shape, lambda i: (0, 0)),
            pl.BlockSpec(whb.shape, lambda i: (0, 0)),
            pl.BlockSpec(a1k.shape, lambda i: (0, 0)),
            pl.BlockSpec(b1t.shape, lambda i: (0, 0)),
            pl.BlockSpec(a2k.shape, lambda i: (0, 0)),
            pl.BlockSpec(b2t.shape, lambda i: (0, 0)),
        ],
        out_specs=pl.BlockSpec((BHout, NCout), lambda i: (0, 0)),
    )(x2d, wwk, whb, a1k, b1t, a2k, b2t)


# --------------------------- host-side parameter prep ------------------------

def _align_corners_matrix(n_in, n_out):
    """M (n_out, n_in): out = M @ in, bilinear, align_corners=True."""
    if n_in == 1:
        return np.ones((n_out, 1), np.float32)
    i = np.arange(n_out, dtype=np.float64)
    src = i * (n_in - 1) / (n_out - 1)
    lo = np.clip(np.floor(src).astype(np.int64), 0, n_in - 2)
    frac = (src - lo).astype(np.float32)
    m = np.zeros((n_out, n_in), np.float32)
    m[np.arange(n_out), lo] += 1.0 - frac
    m[np.arange(n_out), lo + 1] += frac
    return m


def _width_kron(ww, cin):
    """Wwk[(w*Cin + c), (wo*Cin + c)] = Ww[wo, w]  (width interp acting on (.., W*Cin))."""
    wout, w_in = ww.shape
    k = np.einsum("ow,ce->wcoe", ww, np.eye(cin, dtype=np.float32))
    return k.reshape(w_in * cin, wout * cin).astype(np.float32)


def _banded_conv_matrices(w_oihw, w_spatial):
    """A[dy][(wi*Cin + ci), (w*Cout + co)] = W[co, ci, dy, dx] with wi = w + dx - 1.

    Encodes the 3x3 conv's width taps + width zero-padding as banded matmul weights."""
    cout, cin, kh, kw = w_oihw.shape
    a = np.zeros((kh, w_spatial * cin, w_spatial * cout), np.float32)
    for dy in range(kh):
        for dx in range(kw):
            blk = np.transpose(w_oihw[:, :, dy, dx])          # (Cin, Cout)
            for w in range(w_spatial):
                wi = w + dx - 1
                if 0 <= wi < w_spatial:
                    a[dy, wi * cin:(wi + 1) * cin, w * cout:(w + 1) * cout] = blk
    return a


def _fold_bn(conv_bias, gamma, beta, mean, var, eps=1e-5):
    scale = gamma / jnp.sqrt(var + eps)
    bias = (conv_bias - mean) * scale + beta
    return scale, bias


def make_params(key, in_channels, out_channels, h, w, batch):
    mid = in_channels // 2
    ks = jax.random.split(key, 12)

    def rnd(k, shape, s=0.1):
        return s * jax.random.normal(k, shape, jnp.float32)

    w1 = rnd(ks[0], (mid, in_channels, 3, 3)); b1 = rnd(ks[1], (mid,))
    g1 = 1.0 + rnd(ks[2], (mid,)); beta1 = rnd(ks[3], (mid,))
    rm1 = rnd(ks[4], (mid,)); rv1 = 0.9 + jnp.abs(rnd(ks[5], (mid,)))

    w2 = rnd(ks[6], (out_channels, mid, 3, 3)); b2 = rnd(ks[7], (out_channels,))
    g2 = 1.0 + rnd(ks[8], (out_channels,)); beta2 = rnd(ks[9], (out_channels,))
    rm2 = rnd(ks[10], (out_channels,)); rv2 = 0.9 + jnp.abs(rnd(ks[11], (out_channels,)))

    scale1, bias1 = _fold_bn(b1, g1, beta1, rm1, rv1)
    scale2, bias2 = _fold_bn(b2, g2, beta2, rm2, rv2)

    hout, wout = 2 * h, 2 * w
    wh = _align_corners_matrix(h, hout)                       # (Hout, H)
    ww = _align_corners_matrix(w, wout)                       # (Wout, W)
    whb = np.kron(np.eye(batch, dtype=np.float32), wh)        # (B*Hout, B*H) block-diag

    # Fold BN scale into conv weights (epilogue = +bias, ReLU), stack dy taps along K.
    w1s = np.asarray(w1) * np.asarray(scale1)[:, None, None, None]
    w2s = np.asarray(w2) * np.asarray(scale2)[:, None, None, None]
    a1k = _banded_conv_matrices(w1s, wout).reshape(3 * wout * in_channels, wout * mid)
    a2k = _banded_conv_matrices(w2s, wout).reshape(3 * wout * mid, wout * out_channels)

    bf16 = jnp.bfloat16
    return {
        # fused-kernel inputs: bf16 MXU operands (cast last), f32 epilogue constants
        "wwk": jnp.asarray(_width_kron(ww, in_channels), bf16),
        "whb": jnp.asarray(whb, bf16),
        "a1k": jnp.asarray(a1k, bf16),
        "b1t": jnp.asarray(np.tile(np.asarray(bias1), wout)[None, :], jnp.float32),
        "a2k": jnp.asarray(a2k, bf16),
        "b2t": jnp.asarray(np.tile(np.asarray(bias2), wout)[None, :], jnp.float32),
        # reference-path params (unfused f32 form, independent check of the folding)
        "Wh": jnp.asarray(wh), "Ww": jnp.asarray(ww),
        "w1_oihw": w1, "w2_oihw": w2,
        "scale1": scale1, "bias1": bias1, "scale2": scale2, "bias2": bias2,
    }


# --------------------------------- forward -----------------------------------

def upsample_forward(x_nchw, params, h, w):
    """Matches UpSample.forward: reshape -> bilinear x2 (align_corners) -> DoubleConv."""
    B = x_nchw.shape[0]
    x = x_nchw.reshape(B, -1, h, w)                                   # as PyTorch does
    cin = x.shape[1]
    hout, wout = 2 * h, 2 * w
    cout = params["b2t"].shape[-1] // wout
    assert params["whb"].shape[0] == B * hout, "params built for a different batch size"

    # NHWC; batch+height folded into matmul rows, width+channel folded into lanes.
    x2d = jnp.transpose(x, (0, 2, 3, 1)).reshape(B * h, w * cin).astype(jnp.bfloat16)
    y2d = fused_upsample_doubleconv(
        x2d, params["wwk"], params["whb"], params["a1k"], params["b1t"],
        params["a2k"], params["b2t"], hout=hout)                      # (B*Hout, Wout*Cout)

    y = y2d.reshape(B, hout, wout, cout)                              # free metadata reshape
    return jnp.transpose(y, (0, 3, 1, 2))                             # back to NCHW


# ----------------------------- pure-JAX reference ----------------------------

def reference_forward(x_nchw, params, h, w):
    B = x_nchw.shape[0]
    x = x_nchw.reshape(B, -1, h, w)
    x = jnp.transpose(x, (0, 2, 3, 1))                                # NHWC
    up = jnp.einsum("oh,pw,bhwc->bopc", params["Wh"], params["Ww"], x)

    def conv_bn_relu(inp, w_oihw, scale, bias):
        w_hwio = jnp.transpose(w_oihw, (2, 3, 1, 0))
        z = lax.conv_general_dilated(
            inp, w_hwio, window_strides=(1, 1), padding=((1, 1), (1, 1)),
            dimension_numbers=("NHWC", "HWIO", "NHWC"))
        return jnp.maximum(z * scale + bias, 0.0)

    y = conv_bn_relu(up, params["w1_oihw"], params["scale1"], params["bias1"])
    y = conv_bn_relu(y, params["w2_oihw"], params["scale2"], params["bias2"])
    return jnp.transpose(y, (0, 3, 1, 2))


# ------------------------------------ main -----------------------------------

if __name__ == "__main__":
    B, C_in, C_out, H0, W0 = 2, 16, 16, 8, 8

    key = jax.random.PRNGKey(0)
    k_x, k_p = jax.random.split(key)
    x = jax.random.normal(k_x, (B, C_in, H0, W0), jnp.float32)
    params = make_params(k_p, C_in, C_out, H0, W0, B)

    out = jax.block_until_ready(upsample_forward(x, params, H0, W0))
    assert out.shape == (B, C_out, 2 * H0, 2 * W0), out.shape

    ref = jax.block_until_ready(reference_forward(x, params, H0, W0))
    err = float(jnp.max(jnp.abs(out - ref)))
    # bf16 MXU operands with f32 accumulation: tolerance loosened vs the pure-f32 path.
    assert err < 1e-1, err

    print("KERNEL_OK")
</pallas_src>

<mosaic_0001>
module attributes {stable_mosaic.version = 11 : i64} {
  func.func @kernel(%arg0: i32, %arg1: memref<16x128xbf16, #tpu.memory_space<vmem>>, %arg2: memref<128x256xbf16, #tpu.memory_space<vmem>>, %arg3: memref<32x16xbf16, #tpu.memory_space<vmem>>, %arg4: memref<768x128xbf16, #tpu.memory_space<vmem>>, %arg5: memref<1x128xf32, #tpu.memory_space<vmem>>, %arg6: memref<384x256xbf16, #tpu.memory_space<vmem>>, %arg7: memref<1x256xf32, #tpu.memory_space<vmem>>, %arg8: memref<32x256xf32, #tpu.memory_space<vmem>>) attributes {dimension_semantics = [#tpu.dimension_semantics<arbitrary>], iteration_bounds = array<i64: 1>, scalar_prefetch = 0 : i64, scratch_operands = 0 : i64, tpu.core_type = #tpu.core_type<tc>, window_params = [{pipeline_mode = #tpu.pipeline_mode<synchronous>, transform_indices = @transform_0, window_bounds = array<i64: 16, 128>}, {pipeline_mode = #tpu.pipeline_mode<synchronous>, transform_indices = @transform_1, window_bounds = array<i64: 128, 256>}, {pipeline_mode = #tpu.pipeline_mode<synchronous>, transform_indices = @transform_2, window_bounds = array<i64: 32, 16>}, {pipeline_mode = #tpu.pipeline_mode<synchronous>, transform_indices = @transform_3, window_bounds = array<i64: 768, 128>}, {pipeline_mode = #tpu.pipeline_mode<synchronous>, transform_indices = @transform_4, window_bounds = array<i64: 1, 128>}, {pipeline_mode = #tpu.pipeline_mode<synchronous>, transform_indices = @transform_5, window_bounds = array<i64: 384, 256>}, {pipeline_mode = #tpu.pipeline_mode<synchronous>, transform_indices = @transform_6, window_bounds = array<i64: 1, 256>}, {pipeline_mode = #tpu.pipeline_mode<synchronous>, transform_indices = @transform_7, window_bounds = array<i64: 32, 256>}]} {
    %c0 = arith.constant 0 : index
    %c0_0 = arith.constant 0 : index
    %0 = vector.load %arg1[%c0, %c0_0] : memref<16x128xbf16, #tpu.memory_space<vmem>>, vector<16x128xbf16>
    %c0_1 = arith.constant 0 : index
    %c0_2 = arith.constant 0 : index
    %1 = vector.load %arg2[%c0_1, %c0_2] : memref<128x256xbf16, #tpu.memory_space<vmem>>, vector<128x256xbf16>
    %cst = arith.constant dense<0.000000e+00> : vector<16x256xf32>
    %2 = tpu.matmul %0, %1, %cst {dimension_numbers = #tpu.dot_dimension_numbers<[1], [0], [0], [1], [0, 0, 1, 1], [], []>} : vector<16x128xbf16>, vector<128x256xbf16>, vector<16x256xf32> -> vector<16x256xf32>
    %c0_3 = arith.constant 0 : index
    %c0_4 = arith.constant 0 : index
    %3 = vector.load %arg3[%c0_3, %c0_4] : memref<32x16xbf16, #tpu.memory_space<vmem>>, vector<32x16xbf16>
    %4 = arith.truncf %2 : vector<16x256xf32> to vector<16x256xbf16>
    %cst_5 = arith.constant dense<0.000000e+00> : vector<32x256xf32>
    %5 = tpu.matmul %3, %4, %cst_5 {dimension_numbers = #tpu.dot_dimension_numbers<[1], [0], [0], [1], [0, 0, 1, 1], [], []>} : vector<32x16xbf16>, vector<16x256xbf16>, vector<32x256xf32> -> vector<32x256xf32>
    %6 = tpu.iota {dimensions = array<i32: 0>} : vector<32x256xi32>
    %c16_i32 = arith.constant 16 : i32
    %c0_i32 = arith.constant 0 : i32
    %7 = arith.cmpi eq, %c16_i32, %c0_i32 : i32
    %c1_i32 = arith.constant 1 : i32
    %8 = arith.select %7, %c1_i32, %c16_i32 : i32
    %9 = vector.broadcast %8 : i32 to vector<32x256xi32>
    %10 = arith.remsi %6, %9 : vector<32x256xi32>
    %c0_i32_6 = arith.constant 0 : i32
    %11 = vector.broadcast %c0_i32_6 : i32 to vector<32x256xi32>
    %12 = arith.cmpi ne, %10, %11 : vector<32x256xi32>
    %c0_i32_7 = arith.constant 0 : i32
    %13 = vector.broadcast %c0_i32_7 : i32 to vector<32x256xi32>
    %14 = arith.cmpi slt, %10, %13 : vector<32x256xi32>
    %c0_i32_8 = arith.constant 0 : i32
    %15 = arith.cmpi slt, %8, %c0_i32_8 : i32
    %16 = vector.broadcast %15 : i1 to vector<32x256xi1>
    %17 = vector.broadcast %16 : vector<32x256xi1> to vector<32x256xi1>
    %18 = arith.xori %14, %17 : vector<32x256xi1>
    %19 = arith.andi %18, %12 : vector<32x256xi1>
    %20 = vector.broadcast %8 : i32 to vector<32x256xi32>
    %21 = arith.addi %10, %20 : vector<32x256xi32>
    %22 = arith.select %19, %21, %10 : vector<32x256xi1>, vector<32x256xi32>
    %c0_i32_9 = arith.constant 0 : i32
    %23 = vector.broadcast %c0_i32_9 : i32 to vector<32x256xi32>
    %24 = arith.cmpi eq, %22, %23 : vector<32x256xi32>
    %c1_i32_10 = arith.constant 1 : i32
    %25 = tpu.dynamic_rotate %5 by %c1_i32_10 dim 0 : vector<32x256xf32>, i32 -> vector<32x256xf32>
    %cst_11 = arith.constant 0.000000e+00 : f32
    %26 = vector.broadcast %cst_11 : f32 to vector<32x256xf32>
    %27 = arith.select %24, %26, %25 : vector<32x256xi1>, vector<32x256xf32>
    %c15_i32 = arith.constant 15 : i32
    %28 = vector.broadcast %c15_i32 : i32 to vector<32x256xi32>
    %29 = arith.cmpi eq, %22, %28 : vector<32x256xi32>
    %c31_i32 = arith.constant 31 : i32
    %30 = tpu.dynamic_rotate %5 by %c31_i32 dim 0 : vector<32x256xf32>, i32 -> vector<32x256xf32>
    %cst_12 = arith.constant 0.000000e+00 : f32
    %31 = vector.broadcast %cst_12 : f32 to vector<32x256xf32>
    %32 = arith.select %29, %31, %30 : vector<32x256xi1>, vector<32x256xf32>
    %33 = tpu.concatenate %27, %5, %32 in 1 : vector<32x256xf32>, vector<32x256xf32>, vector<32x256xf32> -> vector<32x768xf32>
    %34 = arith.truncf %33 : vector<32x768xf32> to vector<32x768xbf16>
    %c0_13 = arith.constant 0 : index
    %c0_14 = arith.constant 0 : index
    %35 = vector.load %arg4[%c0_13, %c0_14] : memref<768x128xbf16, #tpu.memory_space<vmem>>, vector<768x128xbf16>
    %cst_15 = arith.constant dense<0.000000e+00> : vector<32x128xf32>
    %36 = tpu.matmul %34, %35, %cst_15 {dimension_numbers = #tpu.dot_dimension_numbers<[1], [0], [0], [1], [0, 0, 1, 1], [], []>} : vector<32x768xbf16>, vector<768x128xbf16>, vector<32x128xf32> -> vector<32x128xf32>
    %c0_16 = arith.constant 0 : index
    %c0_17 = arith.constant 0 : index
    %37 = vector.load %arg5[%c0_16, %c0_17] : memref<1x128xf32, #tpu.memory_space<vmem>>, vector<1x128xf32>
    %38 = vector.broadcast %37 : vector<1x128xf32> to vector<32x128xf32>
    %39 = arith.addf %36, %38 : vector<32x128xf32>
    %cst_18 = arith.constant 0.000000e+00 : f32
    %40 = vector.broadcast %cst_18 : f32 to vector<32x128xf32>
    %41 = arith.maximumf %39, %40 : vector<32x128xf32>
    %42 = tpu.iota {dimensions = array<i32: 0>} : vector<32x128xi32>
    %c16_i32_19 = arith.constant 16 : i32
    %c0_i32_20 = arith.constant 0 : i32
    %43 = arith.cmpi eq, %c16_i32_19, %c0_i32_20 : i32
    %c1_i32_21 = arith.constant 1 : i32
    %44 = arith.select %43, %c1_i32_21, %c16_i32_19 : i32
    %45 = vector.broadcast %44 : i32 to vector<32x128xi32>
    %46 = arith.remsi %42, %45 : vector<32x128xi32>
    %c0_i32_22 = arith.constant 0 : i32
    %47 = vector.broadcast %c0_i32_22 : i32 to vector<32x128xi32>
    %48 = arith.cmpi ne, %46, %47 : vector<32x128xi32>
    %c0_i32_23 = arith.constant 0 : i32
    %49 = vector.broadcast %c0_i32_23 : i32 to vector<32x128xi32>
    %50 = arith.cmpi slt, %46, %49 : vector<32x128xi32>
    %c0_i32_24 = arith.constant 0 : i32
    %51 = arith.cmpi slt, %44, %c0_i32_24 : i32
    %52 = vector.broadcast %51 : i1 to vector<32x128xi1>
    %53 = vector.broadcast %52 : vector<32x128xi1> to vector<32x128xi1>
    %54 = arith.xori %50, %53 : vector<32x128xi1>
    %55 = arith.andi %54, %48 : vector<32x128xi1>
    %56 = vector.broadcast %44 : i32 to vector<32x128xi32>
    %57 = arith.addi %46, %56 : vector<32x128xi32>
    %58 = arith.select %55, %57, %46 : vector<32x128xi1>, vector<32x128xi32>
    %c0_i32_25 = arith.constant 0 : i32
    %59 = vector.broadcast %c0_i32_25 : i32 to vector<32x128xi32>
    %60 = arith.cmpi eq, %58, %59 : vector<32x128xi32>
    %c1_i32_26 = arith.constant 1 : i32
    %61 = tpu.dynamic_rotate %41 by %c1_i32_26 dim 0 : vector<32x128xf32>, i32 -> vector<32x128xf32>
    %cst_27 = arith.constant 0.000000e+00 : f32
    %62 = vector.broadcast %cst_27 : f32 to vector<32x128xf32>
    %63 = arith.select %60, %62, %61 : vector<32x128xi1>, vector<32x128xf32>
    %c15_i32_28 = arith.constant 15 : i32
    %64 = vector.broadcast %c15_i32_28 : i32 to vector<32x128xi32>
    %65 = arith.cmpi eq, %58, %64 : vector<32x128xi32>
    %c31_i32_29 = arith.constant 31 : i32
    %66 = tpu.dynamic_rotate %41 by %c31_i32_29 dim 0 : vector<32x128xf32>, i32 -> vector<32x128xf32>
    %cst_30 = arith.constant 0.000000e+00 : f32
    %67 = vector.broadcast %cst_30 : f32 to vector<32x128xf32>
    %68 = arith.select %65, %67, %66 : vector<32x128xi1>, vector<32x128xf32>
    %69 = tpu.concatenate %63, %41, %68 in 1 : vector<32x128xf32>, vector<32x128xf32>, vector<32x128xf32> -> vector<32x384xf32>
    %70 = arith.truncf %69 : vector<32x384xf32> to vector<32x384xbf16>
    %c0_31 = arith.constant 0 : index
    %c0_32 = arith.constant 0 : index
    %71 = vector.load %arg6[%c0_31, %c0_32] : memref<384x256xbf16, #tpu.memory_space<vmem>>, vector<384x256xbf16>
    %cst_33 = arith.constant dense<0.000000e+00> : vector<32x256xf32>
    %72 = tpu.matmul %70, %71, %cst_33 {dimension_numbers = #tpu.dot_dimension_numbers<[1], [0], [0], [1], [0, 0, 1, 1], [], []>} : vector<32x384xbf16>, vector<384x256xbf16>, vector<32x256xf32> -> vector<32x256xf32>
    %c0_34 = arith.constant 0 : index
    %c0_35 = arith.constant 0 : index
    %73 = vector.load %arg7[%c0_34, %c0_35] : memref<1x256xf32, #tpu.memory_space<vmem>>, vector<1x256xf32>
    %74 = vector.broadcast %73 : vector<1x256xf32> to vector<32x256xf32>
    %75 = arith.addf %72, %74 : vector<32x256xf32>
    %cst_36 = arith.constant 0.000000e+00 : f32
    %76 = vector.broadcast %cst_36 : f32 to vector<32x256xf32>
    %77 = arith.maximumf %75, %76 : vector<32x256xf32>
    %c0_37 = arith.constant 0 : index
    %c0_38 = arith.constant 0 : index
    %78 = vector.load %arg8[%c0_37, %c0_38] : memref<32x256xf32, #tpu.memory_space<vmem>>, vector<32x256xf32>
    tpu.vector_store %arg8[%c0_37, %c0_38], %77 {strides = array<i32>} : memref<32x256xf32, #tpu.memory_space<vmem>>, vector<32x256xf32>,
    return
  }
  func.func @transform_0(%arg0: i32) -> (i32, i32) {
    %c0_i32 = arith.constant 0 : i32
    %c0_i32_0 = arith.constant 0 : i32
    %c0_i32_1 = arith.constant 0 : i32
    return %c0_i32, %c0_i32_0 : i32, i32
  }
  func.func @transform_1(%arg0: i32) -> (i32, i32) {
    %c0_i32 = arith.constant 0 : i32
    %c0_i32_0 = arith.constant 0 : i32
    %c0_i32_1 = arith.constant 0 : i32
    return %c0_i32, %c0_i32_0 : i32, i32
  }
  func.func @transform_2(%arg0: i32) -> (i32, i32) {
    %c0_i32 = arith.constant 0 : i32
    %c0_i32_0 = arith.constant 0 : i32
    %c0_i32_1 = arith.constant 0 : i32
    return %c0_i32, %c0_i32_0 : i32, i32
  }
  func.func @transform_3(%arg0: i32) -> (i32, i32) {
    %c0_i32 = arith.constant 0 : i32
    %c0_i32_0 = arith.constant 0 : i32
    %c0_i32_1 = arith.constant 0 : i32
    return %c0_i32, %c0_i32_0 : i32, i32
  }
  func.func @transform_4(%arg0: i32) -> (i32, i32) {
    %c0_i32 = arith.constant 0 : i32
    %c0_i32_0 = arith.constant 0 : i32
    %c0_i32_1 = arith.constant 0 : i32
    return %c0_i32, %c0_i32_0 : i32, i32
  }
  func.func @transform_5(%arg0: i32) -> (i32, i32) {
    %c0_i32 = arith.constant 0 : i32
    %c0_i32_0 = arith.constant 0 : i32
    %c0_i32_1 = arith.constant 0 : i32
    return %c0_i32, %c0_i32_0 : i32, i32
  }
  func.func @transform_6(%arg0: i32) -> (i32, i32) {
    %c0_i32 = arith.constant 0 : i32
    %c0_i32_0 = arith.constant 0 : i32
    %c0_i32_1 = arith.constant 0 : i32
    return %c0_i32, %c0_i32_0 : i32, i32
  }
  func.func @transform_7(%arg0: i32) -> (i32, i32) {
    %c0_i32 = arith.constant 0 : i32
    %c0_i32_0 = arith.constant 0 : i32
    %c0_i32_1 = arith.constant 0 : i32
    return %c0_i32, %c0_i32_0 : i32, i32
  }
}

</mosaic_0001>

<llo_original>
// kernel: tpu_custom_call.1
$region0: #{tpu_custom_call.1}
  #allocation0 [shape = 'u32[]', space=smem, size = 0x4, offset = 0x4, fixed_abs, tag = 'smem constant byte address 0x4 - core index']
  #allocation1 [shape = 'u32[144,128]{1,0:T(1,128)}', space=vmem, size = 0x12000, scoped, tag = 'internal scratch']
  %s0 = inlined_call_operand.vmem [shape: bf16[16,128], index: 0, kind: input, shape index: {}]
  %s1 = inlined_call_operand.hbm [shape: bf16[128,256], index: 1, kind: input, shape index: {}]
  %s2 = inlined_call_operand.vmem [shape: bf16[32,16], index: 2, kind: input, shape index: {}]
  %s3 = inlined_call_operand.hbm [shape: bf16[768,128], index: 3, kind: input, shape index: {}]
  %s4 = inlined_call_operand.vmem [shape: f32[1,128], index: 4, kind: input, shape index: {}]
  %s5 = inlined_call_operand.hbm [shape: bf16[384,256], index: 5, kind: input, shape index: {}]
  %s6 = inlined_call_operand.vmem [shape: f32[1,256], index: 6, kind: input, shape index: {}]
  %s7 = inlined_call_operand.hbm [shape: f32[32,256], index: 7, kind: output, shape index: {}]
  %s8 = sld [smem:[#allocation0]]
  $region50: #{tpu_custom_call.1} parent=0
    _
  %s10 = ssub.s32 1, %s8
  %s11 = scalar_select 0, %s10, %s8
  $region1: #{tpu_custom_call.1} parent=0
    #allocation2 [shape = 'u8[65536]{0}', space=vmem, size = 0x10000, scoped, tag = 'input window, operand 1, single buffered']
    #allocation3 [shape = 's32[1]{0}', space=sflag, size = 0x4, scoped, tag = 'scoped memory for tpu_custom_call.1']
    #allocation4 [shape = 's32[1]{0}', space=sflag, size = 0x4, scoped, tag = 'scoped memory for tpu_custom_call.1']
    #allocation5 [shape = 'u8[196608]{0}', space=vmem, size = 0x30000, scoped, tag = 'input window, operand 3, single buffered']
    #allocation6 [shape = 's32[1]{0}', space=sflag, size = 0x4, scoped, tag = 'scoped memory for tpu_custom_call.1']
    #allocation7 [shape = 'u8[196608]{0}', space=vmem, size = 0x30000, scoped, tag = 'input window, operand 5, single buffered']
    #allocation8 [shape = 'u8[32768]{0}', space=vmem, size = 0x8000, scoped, tag = 'output window, operand 0, single buffered']
    %12 = vsyncpa [#allocation3], 0
    %13 = vsyncpa [#allocation6], 0
    %14 = vsyncpa [#allocation4], 0
    // Predicated region
    $region2: #{tpu_custom_call.1} parent=1 // pred_check
      _
    $region3: #{tpu_custom_call.1} parent=1 // pred_check_branch
      %16 = sbr.rel (0) target = $region5
    $region4: #{tpu_custom_call.1} parent=1 // pred_region
      _
    $region5: #{tpu_custom_call.1} parent=1 // pred_fallthru
      _
    // Predicated region
    $region6: #{tpu_custom_call.1} parent=1 // pred_check
      _
    $region7: #{tpu_custom_call.1} parent=1 // pred_check_branch
      %18 = sbr.rel (0) target = $region9
    $region8: #{tpu_custom_call.1} parent=1 // pred_region
      %s20 = ssub.s32 2048, 2048
      %21 = vsyncadd [#allocation3], %s20
      %s22 = sshll.u32 [#allocation2], 4
      %s23 = int_to_ptr.vmem [resolvable:$true] %s22
      %28 = dma.hbm_to_vmem [thread:$0]  %s1, 2048, %s23, [#allocation3], 128, 128, 8
    $region9: #{tpu_custom_call.1} parent=1 // pred_fallthru
      _
    // Predicated region
    $region10: #{tpu_custom_call.1} parent=1 // pred_check
      _
    $region11: #{tpu_custom_call.1} parent=1 // pred_check_branch
      %30 = sbr.rel (0) target = $region13
    $region12: #{tpu_custom_call.1} parent=1 // pred_region
      _
    $region13: #{tpu_custom_call.1} parent=1 // pred_fallthru
      _
    // Predicated region
    $region14: #{tpu_custom_call.1} parent=1 // pred_check
      _
    $region15: #{tpu_custom_call.1} parent=1 // pred_check_branch
      %32 = sbr.rel (0) target = $region17
    $region16: #{tpu_custom_call.1} parent=1 // pred_region
      %s34 = ssub.s32 6144, 6144
      %35 = vsyncadd [#allocation6], %s34
      %s36 = sshll.u32 [#allocation5], 4
      %s37 = int_to_ptr.vmem [resolvable:$true] %s36
      %42 = dma.hbm_to_vmem [thread:$0]  %s3, 6144, %s37, [#allocation6], 64, 64, 4
    $region17: #{tpu_custom_call.1} parent=1 // pred_fallthru
      _
    // Predicated region
    $region18: #{tpu_custom_call.1} parent=1 // pred_check
      _
    $region19: #{tpu_custom_call.1} parent=1 // pred_check_branch
      %44 = sbr.rel (0) target = $region21
    $region20: #{tpu_custom_call.1} parent=1 // pred_region
      _
    $region21: #{tpu_custom_call.1} parent=1 // pred_fallthru
      _
    // Predicated region
    $region22: #{tpu_custom_call.1} parent=1 // pred_check
      _
    $region23: #{tpu_custom_call.1} parent=1 // pred_check_branch
      %46 = sbr.rel (0) target = $region25
    $region24: #{tpu_custom_call.1} parent=1 // pred_region
      %s48 = ssub.s32 6144, 6144
      %49 = vsyncadd [#allocation6], %s48
      %s50 = sshll.u32 [#allocation7], 4
      %s51 = int_to_ptr.vmem [resolvable:$true] %s50
      %56 = dma.hbm_to_vmem [thread:$0]  %s5, 6144, %s51, [#allocation6], 128, 128, 8
    $region25: #{tpu_custom_call.1} parent=1 // pred_fallthru
      _
    // Predicated region
    $region26: #{tpu_custom_call.1} parent=1 // pred_check
      _
    $region27: #{tpu_custom_call.1} parent=1 // pred_check_branch
      %58 = sbr.rel (0) target = $region29
    $region28: #{tpu_custom_call.1} parent=1 // pred_region
      _
    $region29: #{tpu_custom_call.1} parent=1 // pred_fallthru
      _
    // Predicated region
    $region30: #{tpu_custom_call.1} parent=1 // pred_check
      _
    $region31: #{tpu_custom_call.1} parent=1 // pred_check_branch
      %60 = sbr.rel (0) target = $region33
    $region32: #{tpu_custom_call.1} parent=1 // pred_region
      %61 = dma.done [#allocation3], 2048
    $region33: #{tpu_custom_call.1} parent=1 // pred_fallthru
      _
    // Predicated region
    $region34: #{tpu_custom_call.1} parent=1 // pred_check
      _
    $region35: #{tpu_custom_call.1} parent=1 // pred_check_branch
      %63 = sbr.rel (0) target = $region37
    $region36: #{tpu_custom_call.1} parent=1 // pred_region
      %64 = dma.done [#allocation6], 6144
    $region37: #{tpu_custom_call.1} parent=1 // pred_fallthru
      _
    // Predicated region
    $region38: #{tpu_custom_call.1} parent=1 // pred_check
      _
    $region39: #{tpu_custom_call.1} parent=1 // pred_check_branch
      %66 = sbr.rel (0) target = $region41
    $region40: #{tpu_custom_call.1} parent=1 // pred_region
      %67 = dma.done [#allocation6], 6144
    $region41: #{tpu_custom_call.1} parent=1 // pred_fallthru
      _
    %v69 = vld [vmem:[%s0] sm:$0xf]
    %v70 = vld [vmem:[%s0 + $0x4] sm:$0xf]
    %v71 = vld [vmem:[#allocation2] sm:$0xff]
    %v72 = vld [vmem:[#allocation2 + $0x8] sm:$0xff]
    %v73 = vld [vmem:[#allocation2 + $0x10] sm:$0xff]
    %v74 = vld [vmem:[#allocation2 + $0x18] sm:$0xff]
    %v75 = vld [vmem:[#allocation2 + $0x20] sm:$0xff]
    %v76 = vld [vmem:[#allocation2 + $0x28] sm:$0xff]
    %v77 = vld [vmem:[#allocation2 + $0x30] sm:$0xff]
    %v78 = vld [vmem:[#allocation2 + $0x38] sm:$0xff]
    %v79 = vld [vmem:[#allocation2 + $0x40] sm:$0xff]
    %v80 = vld [vmem:[#allocation2 + $0x48] sm:$0xff]
    %v81 = vld [vmem:[#allocation2 + $0x50] sm:$0xff]
    %v82 = vld [vmem:[#allocation2 + $0x58] sm:$0xff]
    %v83 = vld [vmem:[#allocation2 + $0x60] sm:$0xff]
    %v84 = vld [vmem:[#allocation2 + $0x68] sm:$0xff]
    %v85 = vld [vmem:[#allocation2 + $0x70] sm:$0xff]
    %v86 = vld [vmem:[#allocation2 + $0x78] sm:$0xff]
    %v89 = vunpack.c.l.b16 %v69
    %v90 = vunpack.c.l.b16 %v70
    %v91 = vpack.c.b16 %v90, %v89
    %v109 = vunpack.c.l.b16 %v71
    %v110 = vunpack.c.h.b16 %v71
    %v111 = vunpack.c.l.b16 %v72
    %v112 = vunpack.c.h.b16 %v72
    %v113 = vunpack.c.l.b16 %v73
    %v114 = vunpack.c.h.b16 %v73
    %v115 = vunpack.c.l.b16 %v74
    %v116 = vunpack.c.h.b16 %v74
    %v117 = vunpack.c.l.b16 %v75
    %v118 = vunpack.c.h.b16 %v75
    %v119 = vunpack.c.l.b16 %v76
    %v120 = vunpack.c.h.b16 %v76
    %v121 = vunpack.c.l.b16 %v77
    %v122 = vunpack.c.h.b16 %v77
    %v123 = vunpack.c.l.b16 %v78
    %v124 = vunpack.c.h.b16 %v78
    %v125 = vunpack.c.l.b16 %v79
    %v126 = vunpack.c.h.b16 %v79
    %v127 = vunpack.c.l.b16 %v80
    %v128 = vunpack.c.h.b16 %v80
    %v129 = vunpack.c.l.b16 %v81
    %v130 = vunpack.c.h.b16 %v81
    %v131 = vunpack.c.l.b16 %v82
    %v132 = vunpack.c.h.b16 %v82
    %v133 = vunpack.c.l.b16 %v83
    %v134 = vunpack.c.h.b16 %v83
    %v135 = vunpack.c.l.b16 %v84
    %v136 = vunpack.c.h.b16 %v84
    %v137 = vunpack.c.l.b16 %v85
    %v138 = vunpack.c.h.b16 %v85
    %v139 = vunpack.c.l.b16 %v86
    %v140 = vunpack.c.h.b16 %v86
    %v141 = vpack.c.b16 %v111, %v109
    %v142 = vpack.c.b16 %v112, %v110
    %v143 = vpack.c.b16 %v115, %v113
    %v144 = vpack.c.b16 %v116, %v114
    %v145 = vpack.c.b16 %v119, %v117
    %v146 = vpack.c.b16 %v120, %v118
    %v147 = vpack.c.b16 %v123, %v121
    %v148 = vpack.c.b16 %v124, %v122
    %v149 = vpack.c.b16 %v127, %v125
    %v150 = vpack.c.b16 %v128, %v126
    %v151 = vpack.c.b16 %v131, %v129
    %v152 = vpack.c.b16 %v132, %v130
    %v153 = vpack.c.b16 %v135, %v133
    %v154 = vpack.c.b16 %v136, %v134
    %v155 = vpack.c.b16 %v139, %v137
    %v156 = vpack.c.b16 %v140, %v138
    %173 = vmatprep.subr.bf16.mxu0 %v142
    %174 = vmatpush1.bf16.msra.mxu0 %v141
    %175 = vmatprep.subr.bf16.mxu0 %v144
    %176 = vmatpush1.bf16.msra.mxu0 %v143
    %177 = vmatprep.subr.bf16.mxu0 %v146
    %178 = vmatpush1.bf16.msra.mxu0 %v145
    %179 = vmatprep.subr.bf16.mxu0 %v148
    %180 = vmatpush1.bf16.msra.mxu0 %v147
    %181 = vmatprep.subr.bf16.mxu0 %v150
    %182 = vmatpush1.bf16.msra.mxu0 %v149
    %183 = vmatprep.subr.bf16.mxu0 %v152
    %184 = vmatpush1.bf16.msra.mxu0 %v151
    %185 = vmatprep.subr.bf16.mxu0 %v154
    %186 = vmatpush1.bf16.msra.mxu0 %v153
    %187 = vmatprep.subr.bf16.mxu0 %v156
    %188 = vmatpush1.bf16.msra.mxu0 %v155
    %189 = vmatprep.subr.bf16.mxu0 0
    %190 = vmatpush1.bf16.msra.mxu0 0
    %191 = vmatprep.subr.bf16.mxu0 0
    %192 = vmatpush1.bf16.msra.mxu0 0
    %193 = vmatprep.subr.bf16.mxu0 0
    %194 = vmatpush1.bf16.msra.mxu0 0
    %195 = vmatprep.subr.bf16.mxu0 0
    %196 = vmatpush1.bf16.msra.mxu0 0
    %197 = vmatprep.subr.bf16.mxu0 0
    %198 = vmatpush1.bf16.msra.mxu0 0
    %199 = vmatprep.subr.bf16.mxu0 0
    %200 = vmatpush1.bf16.msra.mxu0 0
    %201 = vmatprep.subr.bf16.mxu0 0
    %202 = vmatpush1.bf16.msra.mxu0 0
    %203 = vmatprep.subr.bf16.mxu0 0
    %204 = vmatpush1.bf16.msra.mxu0 0
    %205 = vmatprep.mubr.bf16.mxu0 0
    %206 = vmatmul.mubr.bf16.gmra.mrb[0].mxu0 %v91
    %v207 = vpop.f32.mrb[0].mxu0
    %v208 = vadd.f32 0.0, %v207
    %v209 = vpop.f32.mrb[0].mxu0
    %v210 = vadd.f32 0.0, %v209
    %v211 = vpop.f32.mrb[0].mxu0
    %v212 = vadd.f32 0.0, %v211
    %v213 = vpop.f32.mrb[0].mxu0
    %v214 = vadd.f32 0.0, %v213
    %215 = vdwg.mxu0
    %v216 = vld [vmem:[%s2] sm:$0xf]
    %v217 = vld [vmem:[%s2 + $0x4] sm:$0xf]
    %v218 = vld [vmem:[%s2 + $0x8] sm:$0xf]
    %v219 = vld [vmem:[%s2 + $0xc] sm:$0xf]
    %v220 = vpack.c.bf16 %v212, %v208
    %v221 = vpack.c.bf16 %v214, %v210
    %v226 = vunpack.c.l.b16 %v216
    %v227 = vunpack.c.l.b16 %v217
    %v228 = vunpack.c.l.b16 %v218
    %v229 = vunpack.c.l.b16 %v219
    %v230 = vpack.c.b16 %v227, %v226
    %v231 = vpack.c.b16 %v229, %v228
    %vm232 = vcmask 130048
    %v234 = vsel %vm232, %v230, 0
    %v237 = vsel %vm232, %v231, 0
    %239 = vmatprep.subr.bf16.mxu0 %v221
    %240 = vmatpush1.bf16.msra.mxu0 %v220
    %241 = vmatprep.subr.bf16.mxu0 0
    %242 = vmatpush1.bf16.msra.mxu0 0
    %243 = vmatprep.subr.bf16.mxu0 0
    %244 = vmatpush1.bf16.msra.mxu0 0
    %245 = vmatprep.subr.bf16.mxu0 0
    %246 = vmatpush1.bf16.msra.mxu0 0
    %247 = vmatprep.subr.bf16.mxu0 0
    %248 = vmatpush1.bf16.msra.mxu0 0
    %249 = vmatprep.subr.bf16.mxu0 0
    %250 = vmatpush1.bf16.msra.mxu0 0
    %251 = vmatprep.subr.bf16.mxu0 0
    %252 = vmatpush1.bf16.msra.mxu0 0
    %253 = vmatprep.subr.bf16.mxu0 0
    %254 = vmatpush1.bf16.msra.mxu0 0
    %255 = vmatprep.subr.bf16.mxu0 0
    %256 = vmatpush1.bf16.msra.mxu0 0
    %257 = vmatprep.subr.bf16.mxu0 0
    %258 = vmatpush1.bf16.msra.mxu0 0
    %259 = vmatprep.subr.bf16.mxu0 0
    %260 = vmatpush1.bf16.msra.mxu0 0
    %261 = vmatprep.subr.bf16.mxu0 0
    %262 = vmatpush1.bf16.msra.mxu0 0
    %263 = vmatprep.subr.bf16.mxu0 0
    %264 = vmatpush1.bf16.msra.mxu0 0
    %265 = vmatprep.subr.bf16.mxu0 0
    %266 = vmatpush1.bf16.msra.mxu0 0
    %267 = vmatprep.subr.bf16.mxu0 0
    %268 = vmatpush1.bf16.msra.mxu0 0
    %269 = vmatprep.subr.bf16.mxu0 0
    %270 = vmatpush1.bf16.msra.mxu0 0
    %271 = vmatprep.mubr.bf16.mxu0 0
    %272 = vmatmul.mubr.bf16.gmra.mrb[0].mxu0 %v234
    %v273 = vpop.f32.mrb[0].mxu0
    %v274 = vadd.f32 0.0, %v273
    %v275 = vpop.f32.mrb[0].mxu0
    %v276 = vadd.f32 0.0, %v275
    %v277 = vpop.f32.mrb[0].mxu0
    %v278 = vadd.f32 0.0, %v277
    %v279 = vpop.f32.mrb[0].mxu0
    %v280 = vadd.f32 0.0, %v279
    %281 = vmatprep.mubr.bf16.mxu0 0
    %282 = vmatmul.mubr.bf16.gmra.mrb[0].mxu0 %v237
    %v283 = vpop.f32.mrb[0].mxu0
    %v284 = vadd.f32 0.0, %v283
    %v285 = vpop.f32.mrb[0].mxu0
    %v286 = vadd.f32 0.0, %v285
    %v287 = vpop.f32.mrb[0].mxu0
    %v288 = vadd.f32 0.0, %v287
    %v289 = vpop.f32.mrb[0].mxu0
    %v290 = vadd.f32 0.0, %v289
    %291 = vdwg.mxu0
    %v292 = vlaneseq
    %v293 = vshrl.u32 %v292, 7
    %v294 = vadd.s32 %v293, 8
    %v295 = vadd.s32 %v293, 16
    %v296 = vadd.s32 %v293, 24
    %vm297 = vcmp.lt.s32.totalorder %v293, 0
    %v298 = vsub.s32 0, %v293
    %v299 = vsel %vm297, %v298, %v293
    %v300 = vshrl.u32 %v299, 4
    %v301 = vand.u32 %v299, 15
    %v302 = vsub.s32 0, %v301
    %v303 = vsel %vm297, %v302, %v301
    %vm304 = vcmp.lt.s32.totalorder %v294, 0
    %v305 = vsub.s32 0, %v294
    %v306 = vsel %vm304, %v305, %v294
    %v307 = vshrl.u32 %v306, 4
    %v308 = vand.u32 %v306, 15
    %v309 = vsub.s32 0, %v308
    %v310 = vsel %vm304, %v309, %v308
    %vm311 = vcmp.lt.s32.totalorder %v295, 0
    %v312 = vsub.s32 0, %v295
    %v313 = vsel %vm311, %v312, %v295
    %v314 = vshrl.u32 %v313, 4
    %v315 = vand.u32 %v313, 15
    %v316 = vsub.s32 0, %v315
    %v317 = vsel %vm311, %v316, %v315
    %vm318 = vcmp.lt.s32.totalorder %v296, 0
    %v319 = vsub.s32 0, %v296
    %v320 = vsel %vm318, %v319, %v296
    %v321 = vshrl.u32 %v320, 4
    %v322 = vand.u32 %v320, 15
    %v323 = vsub.s32 0, %v322
    %v324 = vsel %vm318, %v323, %v322
    %vm325 = vcmp.ne.s32.totalorder %v303, 0
    %vm326 = vcmp.ne.s32.totalorder %v310, 0
    %vm327 = vcmp.ne.s32.totalorder %v317, 0
    %vm328 = vcmp.ne.s32.totalorder %v324, 0
    %vm329 = vcmp.lt.s32.totalorder %v303, 0
    %vm330 = vcmp.lt.s32.totalorder %v310, 0
    %vm331 = vcmp.lt.s32.totalorder %v317, 0
    %vm332 = vcmp.lt.s32.totalorder %v324, 0
    %vm333 = vmand %vm329, %vm325
    %vm334 = vmand %vm330, %vm326
    %vm335 = vmand %vm331, %vm327
    %vm336 = vmand %vm332, %vm328
    %v337 = vadd.s32 %v303, 16
    %v338 = vadd.s32 %v310, 16
    %v339 = vadd.s32 %v317, 16
    %v340 = vadd.s32 %v324, 16
    %v341 = vsel %vm333, %v337, %v303
    %v342 = vsel %vm334, %v338, %v310
    %v343 = vsel %vm335, %v339, %v317
    %v344 = vsel %vm336, %v340, %v324
    %vm345 = vcmp.eq.s32.totalorder %v341, 0
    %vm346 = vcmp.eq.s32.totalorder %v342, 0
    %vm347 = vcmp.eq.s32.totalorder %v343, 0
    %vm348 = vcmp.eq.s32.totalorder %v344, 0
    %v349 = vrot.slane %v274, 7
    %v350 = vrot.slane %v276, 7
    %v351 = vrot.slane %v278, 7
    %v352 = vrot.slane %v280, 7
    %v353 = vrot.slane %v284, 7
    %v354 = vrot.slane %v286, 7
    %v355 = vrot.slane %v288, 7
    %v356 = vrot.slane %v290, 7
    %vm357 = vcmp.lt.s32.totalorder %v293, 1
    %v358 = vsel %vm357, %v353, %v355
    %v359 = vsel %vm357, %v354, %v356
    %v360 = vsel %vm357, %v351, %v353
    %v361 = vsel %vm357, %v352, %v354
    %v362 = vsel %vm357, %v349, %v351
    %v363 = vsel %vm357, %v350, %v352
    %v364 = vsel %vm357, %v355, %v349
    %v365 = vsel %vm357, %v356, %v350
    %v366 = vsel %vm345, 0.0, %v364
    %v367 = vsel %vm345, 0.0, %v365
    %v368 = vsel %vm346, 0.0, %v362
    %v369 = vsel %vm346, 0.0, %v363
    %v370 = vsel %vm347, 0.0, %v360
    %v371 = vsel %vm347, 0.0, %v361
    %v372 = vsel %vm348, 0.0, %v358
    %v373 = vsel %vm348, 0.0, %v359
    %vm374 = vcmp.eq.s32.totalorder %v341, 15
    %vm375 = vcmp.eq.s32.totalorder %v342, 15
    %vm376 = vcmp.eq.s32.totalorder %v343, 15
    %vm377 = vcmp.eq.s32.totalorder %v344, 15
    %v378 = vrot.slane %v274, 1
    %v379 = vrot.slane %v276, 1
    %v380 = vrot.slane %v278, 1
    %v381 = vrot.slane %v280, 1
    %v382 = vrot.slane %v284, 1
    %v383 = vrot.slane %v286, 1
    %v384 = vrot.slane %v288, 1
    %v385 = vrot.slane %v290, 1
    %vm386 = vcmp.lt.s32.totalorder %v293, 7
    %v387 = vsel %vm386, %v382, %v384
    %v388 = vsel %vm386, %v383, %v385
    %v389 = vsel %vm386, %v380, %v382
    %v390 = vsel %vm386, %v381, %v383
    %v391 = vsel %vm386, %v378, %v380
    %v392 = vsel %vm386, %v379, %v381
    %v393 = vsel %vm386, %v384, %v378
    %v394 = vsel %vm386, %v385, %v379
    %v395 = vsel %vm374, 0.0, %v391
    %v396 = vsel %vm374, 0.0, %v392
    %v397 = vsel %vm375, 0.0, %v389
    %v398 = vsel %vm375, 0.0, %v390
    %v399 = vsel %vm376, 0.0, %v387
    %v400 = vsel %vm376, 0.0, %v388
    %v401 = vsel %vm377, 0.0, %v393
    %v402 = vsel %vm377, 0.0, %v394
    %v403 = vpack.c.bf16 %v368, %v366
    %v404 = vpack.c.bf16 %v369, %v367
    %v405 = vpack.c.bf16 %v278, %v274
    %v406 = vpack.c.bf16 %v280, %v276
    %v407 = vpack.c.bf16 %v397, %v395
    %v408 = vpack.c.bf16 %v398, %v396
    %v409 = vpack.c.bf16 %v372, %v370
    %v410 = vpack.c.bf16 %v373, %v371
    %v411 = vpack.c.bf16 %v288, %v284
    %v412 = vpack.c.bf16 %v290, %v286
    %v413 = vpack.c.bf16 %v401, %v399
    %v414 = vpack.c.bf16 %v402, %v400
    %v415 = vld [vmem:[#allocation5] sm:$0xf]
    %v416 = vld [vmem:[#allocation5 + $0x4] sm:$0xf]
    %v417 = vld [vmem:[#allocation5 + $0x8] sm:$0xf]
    %v418 = vld [vmem:[#allocation5 + $0xc] sm:$0xf]
    %v419 = vld [vmem:[#allocation5 + $0x10] sm:$0xf]
    %v420 = vld [vmem:[#allocation5 + $0x14] sm:$0xf]
    %v421 = vld [vmem:[#allocation5 + $0x18] sm:$0xf]
    %v422 = vld [vmem:[#allocation5 + $0x1c] sm:$0xf]
    %v423 = vld [vmem:[#allocation5 + $0x20] sm:$0xf]
    %v424 = vld [vmem:[#allocation5 + $0x24] sm:$0xf]
    %v425 = vld [vmem:[#allocation5 + $0x28] sm:$0xf]
    %v426 = vld [vmem:[#allocation5 + $0x2c] sm:$0xf]
    %v427 = vld [vmem:[#allocation5 + $0x30] sm:$0xf]
    %v428 = vld [vmem:[#allocation5 + $0x34] sm:$0xf]
    %v429 = vld [vmem:[#allocation5 + $0x38] sm:$0xf]
    %v430 = vld [vmem:[#allocation5 + $0x3c] sm:$0xf]
    %v431 = vld [vmem:[#allocation5 + $0x40] sm:$0xf]
    %v432 = vld [vmem:[#allocation5 + $0x44] sm:$0xf]
    %v433 = vld [vmem:[#allocation5 + $0x48] sm:$0xf]
    %v434 = vld [vmem:[#allocation5 + $0x4c] sm:$0xf]
    %v435 = vld [vmem:[#allocation5 + $0x50] sm:$0xf]
    %v436 = vld [vmem:[#allocation5 + $0x54] sm:$0xf]
    %v437 = vld [vmem:[#allocation5 + $0x58] sm:$0xf]
    %v438 = vld [vmem:[#allocation5 + $0x5c] sm:$0xf]
    %v439 = vld [vmem:[#allocation5 + $0x60] sm:$0xf]
    %v440 = vld [vmem:[#allocation5 + $0x64] sm:$0xf]
    %v441 = vld [vmem:[#allocation5 + $0x68] sm:$0xf]
    %v442 = vld [vmem:[#allocation5 + $0x6c] sm:$0xf]
    %v443 = vld [vmem:[#allocation5 + $0x70] sm:$0xf]
    %v444 = vld [vmem:[#allocation5 + $0x74] sm:$0xf]
    %v445 = vld [vmem:[#allocation5 + $0x78] sm:$0xf]
    %v446 = vld [vmem:[#allocation5 + $0x7c] sm:$0xf]
    %v447 = vld [vmem:[#allocation5 + $0x80] sm:$0xf]
    %v448 = vld [vmem:[#allocation5 + $0x84] sm:$0xf]
    %v449 = vld [vmem:[#allocation5 + $0x88] sm:$0xf]
    %v450 = vld [vmem:[#allocation5 + $0x8c] sm:$0xf]
    %v451 = vld [vmem:[#allocation5 + $0x90] sm:$0xf]
    %v452 = vld [vmem:[#allocation5 + $0x94] sm:$0xf]
    %v453 = vld [vmem:[#allocation5 + $0x98] sm:$0xf]
    %v454 = vld [vmem:[#allocation5 + $0x9c] sm:$0xf]
    %v455 = vld [vmem:[#allocation5 + $0xa0] sm:$0xf]
    %v456 = vld [vmem:[#allocation5 + $0xa4] sm:$0xf]
    %v457 = vld [vmem:[#allocation5 + $0xa8] sm:$0xf]
    %v458 = vld [vmem:[#allocation5 + $0xac] sm:$0xf]
    %v459 = vld [vmem:[#allocation5 + $0xb0] sm:$0xf]
    %v460 = vld [vmem:[#allocation5 + $0xb4] sm:$0xf]
    %v461 = vld [vmem:[#allocation5 + $0xb8] sm:$0xf]
    %v462 = vld [vmem:[#allocation5 + $0xbc] sm:$0xf]
    %v463 = vld [vmem:[#allocation5 + $0xc0] sm:$0xf]
    %v464 = vld [vmem:[#allocation5 + $0xc4] sm:$0xf]
    %v465 = vld [vmem:[#allocation5 + $0xc8] sm:$0xf]
    %v466 = vld [vmem:[#allocation5 + $0xcc] sm:$0xf]
    %v467 = vld [vmem:[#allocation5 + $0xd0] sm:$0xf]
    %v468 = vld [vmem:[#allocation5 + $0xd4] sm:$0xf]
    %v469 = vld [vmem:[#allocation5 + $0xd8] sm:$0xf]
    %v470 = vld [vmem:[#allocation5 + $0xdc] sm:$0xf]
    %v471 = vld [vmem:[#allocation5 + $0xe0] sm:$0xf]
    %v472 = vld [vmem:[#allocation5 + $0xe4] sm:$0xf]
    %v473 = vld [vmem:[#allocation5 + $0xe8] sm:$0xf]
    %v474 = vld [vmem:[#allocation5 + $0xec] sm:$0xf]
    %v475 = vld [vmem:[#allocation5 + $0xf0] sm:$0xf]
    %v476 = vld [vmem:[#allocation5 + $0xf4] sm:$0xf]
    %v477 = vld [vmem:[#allocation5 + $0xf8] sm:$0xf]
    %v478 = vld [vmem:[#allocation5 + $0xfc] sm:$0xf]
    %v479 = vld [vmem:[#allocation5 + $0x100] sm:$0xf]
    %v480 = vld [vmem:[#allocation5 + $0x104] sm:$0xf]
    %v481 = vld [vmem:[#allocation5 + $0x108] sm:$0xf]
    %v482 = vld [vmem:[#allocation5 + $0x10c] sm:$0xf]
    %v483 = vld [vmem:[#allocation5 + $0x110] sm:$0xf]
    %v484 = vld [vmem:[#allocation5 + $0x114] sm:$0xf]
    %v485 = vld [vmem:[#allocation5 + $0x118] sm:$0xf]
    %v486 = vld [vmem:[#allocation5 + $0x11c] sm:$0xf]
    %v487 = vld [vmem:[#allocation5 + $0x120] sm:$0xf]
    %v488 = vld [vmem:[#allocation5 + $0x124] sm:$0xf]
    %v489 = vld [vmem:[#allocation5 + $0x128] sm:$0xf]
    %v490 = vld [vmem:[#allocation5 + $0x12c] sm:$0xf]
    %v491 = vld [vmem:[#allocation5 + $0x130] sm:$0xf]
    %v492 = vld [vmem:[#allocation5 + $0x134] sm:$0xf]
    %v493 = vld [vmem:[#allocation5 + $0x138] sm:$0xf]
    %v494 = vld [vmem:[#allocation5 + $0x13c] sm:$0xf]
    %v495 = vld [vmem:[#allocation5 + $0x140] sm:$0xf]
    %v496 = vld [vmem:[#allocation5 + $0x144] sm:$0xf]
    %v497 = vld [vmem:[#allocation5 + $0x148] sm:$0xf]
    %v498 = vld [vmem:[#allocation5 + $0x14c] sm:$0xf]
    %v499 = vld [vmem:[#allocation5 + $0x150] sm:$0xf]
    %v500 = vld [vmem:[#allocation5 + $0x154] sm:$0xf]
    %v501 = vld [vmem:[#allocation5 + $0x158] sm:$0xf]
    %v502 = vld [vmem:[#allocation5 + $0x15c] sm:$0xf]
    %v503 = vld [vmem:[#allocation5 + $0x160] sm:$0xf]
    %v504 = vld [vmem:[#allocation5 + $0x164] sm:$0xf]
    %v505 = vld [vmem:[#allocation5 + $0x168] sm:$0xf]
    %v506 = vld [vmem:[#allocation5 + $0x16c] sm:$0xf]
    %v507 = vld [vmem:[#allocation5 + $0x170] sm:$0xf]
    %v508 = vld [vmem:[#allocation5 + $0x174] sm:$0xf]
    %v509 = vld [vmem:[#allocation5 + $0x178] sm:$0xf]
    %v510 = vld [vmem:[#allocation5 + $0x17c] sm:$0xf]
    %v511 = vld [vmem:[%s4] sm:$0x1]
    %v513 = vlaneseq
    %v514 = vshrl.u32 %v513, 7
    %v515 = vsub.s32 0, %v514
    %v516 = vrot.slane %v511, %v515
    %v614 = vunpack.c.l.b16 %v415
    %v615 = vunpack.c.l.b16 %v416
    %v616 = vunpack.c.l.b16 %v417
    %v617 = vunpack.c.l.b16 %v418
    %v618 = vunpack.c.l.b16 %v419
    %v619 = vunpack.c.l.b16 %v420
    %v620 = vunpack.c.l.b16 %v421
    %v621 = vunpack.c.l.b16 %v422
    %v622 = vunpack.c.l.b16 %v423
    %v623 = vunpack.c.l.b16 %v424
    %v624 = vunpack.c.l.b16 %v425
    %v625 = vunpack.c.l.b16 %v426
    %v626 = vunpack.c.l.b16 %v427
    %v627 = vunpack.c.l.b16 %v428
    %v628 = vunpack.c.l.b16 %v429
    %v629 = vunpack.c.l.b16 %v430
    %v630 = vunpack.c.l.b16 %v431
    %v631 = vunpack.c.l.b16 %v432
    %v632 = vunpack.c.l.b16 %v433
    %v633 = vunpack.c.l.b16 %v434
    %v634 = vunpack.c.l.b16 %v435
    %v635 = vunpack.c.l.b16 %v436
    %v636 = vunpack.c.l.b16 %v437
    %v637 = vunpack.c.l.b16 %v438
    %v638 = vunpack.c.l.b16 %v439
    %v639 = vunpack.c.l.b16 %v440
    %v640 = vunpack.c.l.b16 %v441
    %v641 = vunpack.c.l.b16 %v442
    %v642 = vunpack.c.l.b16 %v443
    %v643 = vunpack.c.l.b16 %v444
    %v644 = vunpack.c.l.b16 %v445
    %v645 = vunpack.c.l.b16 %v446
    %v646 = vunpack.c.l.b16 %v447
    %v647 = vunpack.c.l.b16 %v448
    %v648 = vunpack.c.l.b16 %v449
    %v649 = vunpack.c.l.b16 %v450
    %v650 = vunpack.c.l.b16 %v451
    %v651 = vunpack.c.l.b16 %v452
    %v652 = vunpack.c.l.b16 %v453
    %v653 = vunpack.c.l.b16 %v454
    %v654 = vunpack.c.l.b16 %v455
    %v655 = vunpack.c.l.b16 %v456
    %v656 = vunpack.c.l.b16 %v457
    %v657 = vunpack.c.l.b16 %v458
    %v658 = vunpack.c.l.b16 %v459
    %v659 = vunpack.c.l.b16 %v460
    %v660 = vunpack.c.l.b16 %v461
    %v661 = vunpack.c.l.b16 %v462
    %v662 = vunpack.c.l.b16 %v463
    %v663 = vunpack.c.l.b16 %v464
    %v664 = vunpack.c.l.b16 %v465
    %v665 = vunpack.c.l.b16 %v466
    %v666 = vunpack.c.l.b16 %v467
    %v667 = vunpack.c.l.b16 %v468
    %v668 = vunpack.c.l.b16 %v469
    %v669 = vunpack.c.l.b16 %v470
    %v670 = vunpack.c.l.b16 %v471
    %v671 = vunpack.c.l.b16 %v472
    %v672 = vunpack.c.l.b16 %v473
    %v673 = vunpack.c.l.b16 %v474
    %v674 = vunpack.c.l.b16 %v475
    %v675 = vunpack.c.l.b16 %v476
    %v676 = vunpack.c.l.b16 %v477
    %v677 = vunpack.c.l.b16 %v478
    %v678 = vunpack.c.l.b16 %v479
    %v679 = vunpack.c.l.b16 %v480
    %v680 = vunpack.c.l.b16 %v481
    %v681 = vunpack.c.l.b16 %v482
    %v682 = vunpack.c.l.b16 %v483
    %v683 = vunpack.c.l.b16 %v484
    %v684 = vunpack.c.l.b16 %v485
    %v685 = vunpack.c.l.b16 %v486
    %v686 = vunpack.c.l.b16 %v487
    %v687 = vunpack.c.l.b16 %v488
    %v688 = vunpack.c.l.b16 %v489
    %v689 = vunpack.c.l.b16 %v490
    %v690 = vunpack.c.l.b16 %v491
    %v691 = vunpack.c.l.b16 %v492
    %v692 = vunpack.c.l.b16 %v493
    %v693 = vunpack.c.l.b16 %v494
    %v694 = vunpack.c.l.b16 %v495
    %v695 = vunpack.c.l.b16 %v496
    %v696 = vunpack.c.l.b16 %v497
    %v697 = vunpack.c.l.b16 %v498
    %v698 = vunpack.c.l.b16 %v499
    %v699 = vunpack.c.l.b16 %v500
    %v700 = vunpack.c.l.b16 %v501
    %v701 = vunpack.c.l.b16 %v502
    %v702 = vunpack.c.l.b16 %v503
    %v703 = vunpack.c.l.b16 %v504
    %v704 = vunpack.c.l.b16 %v505
    %v705 = vunpack.c.l.b16 %v506
    %v706 = vunpack.c.l.b16 %v507
    %v707 = vunpack.c.l.b16 %v508
    %v708 = vunpack.c.l.b16 %v509
    %v709 = vunpack.c.l.b16 %v510
    %v710 = vpack.c.b16 %v615, %v614
    %v711 = vpack.c.b16 %v617, %v616
    %v712 = vpack.c.b16 %v619, %v618
    %v713 = vpack.c.b16 %v621, %v620
    %v714 = vpack.c.b16 %v623, %v622
    %v715 = vpack.c.b16 %v625, %v624
    %v716 = vpack.c.b16 %v627, %v626
    %v717 = vpack.c.b16 %v629, %v628
    %v718 = vpack.c.b16 %v631, %v630
    %v719 = vpack.c.b16 %v633, %v632
    %v720 = vpack.c.b16 %v635, %v634
    %v721 = vpack.c.b16 %v637, %v636
    %v722 = vpack.c.b16 %v639, %v638
    %v723 = vpack.c.b16 %v641, %v640
    %v724 = vpack.c.b16 %v643, %v642
    %v725 = vpack.c.b16 %v645, %v644
    %v726 = vpack.c.b16 %v647, %v646
    %v727 = vpack.c.b16 %v649, %v648
    %v728 = vpack.c.b16 %v651, %v650
    %v729 = vpack.c.b16 %v653, %v652
    %v730 = vpack.c.b16 %v655, %v654
    %v731 = vpack.c.b16 %v657, %v656
    %v732 = vpack.c.b16 %v659, %v658
    %v733 = vpack.c.b16 %v661, %v660
    %v734 = vpack.c.b16 %v663, %v662
    %v735 = vpack.c.b16 %v665, %v664
    %v736 = vpack.c.b16 %v667, %v666
    %v737 = vpack.c.b16 %v669, %v668
    %v738 = vpack.c.b16 %v671, %v670
    %v739 = vpack.c.b16 %v673, %v672
    %v740 = vpack.c.b16 %v675, %v674
    %v741 = vpack.c.b16 %v677, %v676
    %v742 = vpack.c.b16 %v679, %v678
    %v743 = vpack.c.b16 %v681, %v680
    %v744 = vpack.c.b16 %v683, %v682
    %v745 = vpack.c.b16 %v685, %v684
    %v746 = vpack.c.b16 %v687, %v686
    %v747 = vpack.c.b16 %v689, %v688
    %v748 = vpack.c.b16 %v691, %v690
    %v749 = vpack.c.b16 %v693, %v692
    %v750 = vpack.c.b16 %v695, %v694
    %v751 = vpack.c.b16 %v697, %v696
    %v752 = vpack.c.b16 %v699, %v698
    %v753 = vpack.c.b16 %v701, %v700
    %v754 = vpack.c.b16 %v703, %v702
    %v755 = vpack.c.b16 %v705, %v704
    %v756 = vpack.c.b16 %v707, %v706
    %v757 = vpack.c.b16 %v709, %v708
    %806 = vmatprep.subr.bf16.mxu0 0
    %807 = vmatpush1.bf16.msra.mxu0 %v710
    %808 = vmatprep.subr.bf16.mxu0 0
    %809 = vmatpush1.bf16.msra.mxu0 %v711
    %810 = vmatprep.subr.bf16.mxu0 0
    %811 = vmatpush1.bf16.msra.mxu0 %v712
    %812 = vmatprep.subr.bf16.mxu0 0
    %813 = vmatpush1.bf16.msra.mxu0 %v713
    %814 = vmatprep.subr.bf16.mxu0 0
    %815 = vmatpush1.bf16.msra.mxu0 %v714
    %816 = vmatprep.subr.bf16.mxu0 0
    %817 = vmatpush1.bf16.msra.mxu0 %v715
    %818 = vmatprep.subr.bf16.mxu0 0
    %819 = vmatpush1.bf16.msra.mxu0 %v716
    %820 = vmatprep.subr.bf16.mxu0 0
    %821 = vmatpush1.bf16.msra.mxu0 %v717
    %822 = vmatprep.subr.bf16.mxu0 0
    %823 = vmatpush1.bf16.msra.mxu0 %v718
    %824 = vmatprep.subr.bf16.mxu0 0
    %825 = vmatpush1.bf16.msra.mxu0 %v719
    %826 = vmatprep.subr.bf16.mxu0 0
    %827 = vmatpush1.bf16.msra.mxu0 %v720
    %828 = vmatprep.subr.bf16.mxu0 0
    %829 = vmatpush1.bf16.msra.mxu0 %v721
    %830 = vmatprep.subr.bf16.mxu0 0
    %831 = vmatpush1.bf16.msra.mxu0 %v722
    %832 = vmatprep.subr.bf16.mxu0 0
    %833 = vmatpush1.bf16.msra.mxu0 %v723
    %834 = vmatprep.subr.bf16.mxu0 0
    %835 = vmatpush1.bf16.msra.mxu0 %v724
    %836 = vmatprep.subr.bf16.mxu0 0
    %837 = vmatpush1.bf16.msra.mxu0 %v725
    %838 = vmatprep.mubr.bf16.mxu0 %v404
    %839 = vmatmul.mubr.bf16.gmra.mrb[0].mxu0 %v403
    %v840 = vpop.f32.mrb[0].mxu0
    %v841 = vadd.f32 %v516, %v840
    %v842 = vpop.f32.mrb[0].mxu0
    %v843 = vpop.f32.mrb[0].mxu0
    %v844 = vadd.f32 %v516, %v843
    %v845 = vpop.f32.mrb[0].mxu0
    %846 = vmatprep.mubr.bf16.mxu0 %v410
    %847 = vmatmul.mubr.bf16.gmra.mrb[0].mxu0 %v409
    %v848 = vpop.f32.mrb[0].mxu0
    %v849 = vadd.f32 %v516, %v848
    %v850 = vpop.f32.mrb[0].mxu0
    %v851 = vpop.f32.mrb[0].mxu0
    %v852 = vadd.f32 %v516, %v851
    %v853 = vpop.f32.mrb[0].mxu0
    %854 = vdwg.mxu0
    %855 = vmatprep.subr.bf16.mxu0 0
    %856 = vmatpush1.bf16.msra.mxu0 %v726
    %857 = vmatprep.subr.bf16.mxu0 0
    %858 = vmatpush1.bf16.msra.mxu0 %v727
    %859 = vmatprep.subr.bf16.mxu0 0
    %860 = vmatpush1.bf16.msra.mxu0 %v728
    %861 = vmatprep.subr.bf16.mxu0 0
    %862 = vmatpush1.bf16.msra.mxu0 %v729
    %863 = vmatprep.subr.bf16.mxu0 0
    %864 = vmatpush1.bf16.msra.mxu0 %v730
    %865 = vmatprep.subr.bf16.mxu0 0
    %866 = vmatpush1.bf16.msra.mxu0 %v731
    %867 = vmatprep.subr.bf16.mxu0 0
    %868 = vmatpush1.bf16.msra.mxu0 %v732
    %869 = vmatprep.subr.bf16.mxu0 0
    %870 = vmatpush1.bf16.msra.mxu0 %v733
    %871 = vmatprep.subr.bf16.mxu0 0
    %872 = vmatpush1.bf16.msra.mxu0 %v734
    %873 = vmatprep.subr.bf16.mxu0 0
    %874 = vmatpush1.bf16.msra.mxu0 %v735
    %875 = vmatprep.subr.bf16.mxu0 0
    %876 = vmatpush1.bf16.msra.mxu0 %v736
    %877 = vmatprep.subr.bf16.mxu0 0
    %878 = vmatpush1.bf16.msra.mxu0 %v737
    %879 = vmatprep.subr.bf16.mxu0 0
    %880 = vmatpush1.bf16.msra.mxu0 %v738
    %881 = vmatprep.subr.bf16.mxu0 0
    %882 = vmatpush1.bf16.msra.mxu0 %v739
    %883 = vmatprep.subr.bf16.mxu0 0
    %884 = vmatpush1.bf16.msra.mxu0 %v740
    %885 = vmatprep.subr.bf16.mxu0 0
    %886 = vmatpush1.bf16.msra.mxu0 %v741
    %887 = vmatprep.mubr.bf16.mxu0 %v406
    %888 = vmatmul.mubr.bf16.gmra.mrb[0].mxu0 %v405
    %v889 = vpop.f32.mrb[0].mxu0
    %v890 = vadd.f32 %v841, %v889
    %v891 = vpop.f32.mrb[0].mxu0
    %v892 = vpop.f32.mrb[0].mxu0
    %v893 = vadd.f32 %v844, %v892
    %v894 = vpop.f32.mrb[0].mxu0
    %895 = vmatprep.mubr.bf16.mxu0 %v412
    %896 = vmatmul.mubr.bf16.gmra.mrb[0].mxu0 %v411
    %v897 = vpop.f32.mrb[0].mxu0
    %v898 = vadd.f32 %v849, %v897
    %v899 = vpop.f32.mrb[0].mxu0
    %v900 = vpop.f32.mrb[0].mxu0
    %v901 = vadd.f32 %v852, %v900
    %v902 = vpop.f32.mrb[0].mxu0
    %903 = vdwg.mxu0
    %904 = vmatprep.subr.bf16.mxu0 0
    %905 = vmatpush1.bf16.msra.mxu0 %v742
    %906 = vmatprep.subr.bf16.mxu0 0
    %907 = vmatpush1.bf16.msra.mxu0 %v743
    %908 = vmatprep.subr.bf16.mxu0 0
    %909 = vmatpush1.bf16.msra.mxu0 %v744
    %910 = vmatprep.subr.bf16.mxu0 0
    %911 = vmatpush1.bf16.msra.mxu0 %v745
    %912 = vmatprep.subr.bf16.mxu0 0
    %913 = vmatpush1.bf16.msra.mxu0 %v746
    %914 = vmatprep.subr.bf16.mxu0 0
    %915 = vmatpush1.bf16.msra.mxu0 %v747
    %916 = vmatprep.subr.bf16.mxu0 0
    %917 = vmatpush1.bf16.msra.mxu0 %v748
    %918 = vmatprep.subr.bf16.mxu0 0
    %919 = vmatpush1.bf16.msra.mxu0 %v749
    %920 = vmatprep.subr.bf16.mxu0 0
    %921 = vmatpush1.bf16.msra.mxu0 %v750
    %922 = vmatprep.subr.bf16.mxu0 0
    %923 = vmatpush1.bf16.msra.mxu0 %v751
    %924 = vmatprep.subr.bf16.mxu0 0
    %925 = vmatpush1.bf16.msra.mxu0 %v752
    %926 = vmatprep.subr.bf16.mxu0 0
    %927 = vmatpush1.bf16.msra.mxu0 %v753
    %928 = vmatprep.subr.bf16.mxu0 0
    %929 = vmatpush1.bf16.msra.mxu0 %v754
    %930 = vmatprep.subr.bf16.mxu0 0
    %931 = vmatpush1.bf16.msra.mxu0 %v755
    %932 = vmatprep.subr.bf16.mxu0 0
    %933 = vmatpush1.bf16.msra.mxu0 %v756
    %934 = vmatprep.subr.bf16.mxu0 0
    %935 = vmatpush1.bf16.msra.mxu0 %v757
    %936 = vmatprep.mubr.bf16.mxu0 %v408
    %937 = vmatmul.mubr.bf16.gmra.mrb[0].mxu0 %v407
    %v938 = vpop.f32.mrb[0].mxu0
    %v939 = vadd.f32 %v890, %v938
    %v940 = vpop.f32.mrb[0].mxu0
    %v941 = vpop.f32.mrb[0].mxu0
    %v942 = vadd.f32 %v893, %v941
    %v943 = vpop.f32.mrb[0].mxu0
    %944 = vmatprep.mubr.bf16.mxu0 %v414
    %945 = vmatmul.mubr.bf16.gmra.mrb[0].mxu0 %v413
    %v946 = vpop.f32.mrb[0].mxu0
    %v947 = vadd.f32 %v898, %v946
    %v948 = vpop.f32.mrb[0].mxu0
    %v949 = vpop.f32.mrb[0].mxu0
    %v950 = vadd.f32 %v901, %v949
    %v951 = vpop.f32.mrb[0].mxu0
    %952 = vdwg.mxu0
    %v953 = vmax.f32 %v939, 0.0
    %v954 = vmax.f32 %v942, 0.0
    %v955 = vmax.f32 %v947, 0.0
    %v956 = vmax.f32 %v950, 0.0
    %v957 = vrot.slane %v953, 7
    %v958 = vrot.slane %v954, 7
    %v959 = vrot.slane %v955, 7
    %v960 = vrot.slane %v956, 7
    %v961 = vsel %vm357, %v959, %v960
    %v962 = vsel %vm357, %v958, %v959
    %v963 = vsel %vm357, %v957, %v958
    %v964 = vsel %vm357, %v960, %v957
    %v965 = vsel %vm345, 0.0, %v964
    %v966 = vsel %vm346, 0.0, %v963
    %v967 = vsel %vm347, 0.0, %v962
    %v968 = vsel %vm348, 0.0, %v961
    %v969 = vrot.slane %v953, 1
    %v970 = vrot.slane %v954, 1
    %v971 = vrot.slane %v955, 1
    %v972 = vrot.slane %v956, 1
    %v973 = vsel %vm386, %v971, %v972
    %v974 = vsel %vm386, %v970, %v971
    %v975 = vsel %vm386, %v969, %v970
    %v976 = vsel %vm386, %v972, %v969
    %v977 = vsel %vm374, 0.0, %v975
    %v978 = vsel %vm375, 0.0, %v974
    %v979 = vsel %vm376, 0.0, %v973
    %v980 = vsel %vm377, 0.0, %v976
    %v981 = vpack.c.bf16 %v966, %v965
    %v982 = vpack.c.bf16 %v954, %v953
    %v983 = vpack.c.bf16 %v978, %v977
    %v984 = vpack.c.bf16 %v968, %v967
    %v985 = vpack.c.bf16 %v956, %v955
    %v986 = vpack.c.bf16 %v980, %v979
    %v987 = vld [vmem:[#allocation7] sm:$0xff]
    %v988 = vld [vmem:[#allocation7 + $0x8] sm:$0xff]
    %v989 = vld [vmem:[#allocation7 + $0x10] sm:$0xff]
    %v990 = vld [vmem:[#allocation7 + $0x18] sm:$0xff]
    %v991 = vld [vmem:[#allocation7 + $0x20] sm:$0xff]
    %v992 = vld [vmem:[#allocation7 + $0x28] sm:$0xff]
    %v993 = vld [vmem:[#allocation7 + $0x30] sm:$0xff]
    %v994 = vld [vmem:[#allocation7 + $0x38] sm:$0xff]
    %v995 = vld [vmem:[#allocation7 + $0x40] sm:$0xff]
    %v996 = vld [vmem:[#allocation7 + $0x48] sm:$0xff]
    %v997 = vld [vmem:[#allocation7 + $0x50] sm:$0xff]
    %v998 = vld [vmem:[#allocation7 + $0x58] sm:$0xff]
    %v999 = vld [vmem:[#allocation7 + $0x60] sm:$0xff]
    %v1000 = vld [vmem:[#allocation7 + $0x68] sm:$0xff]
    %v1001 = vld [vmem:[#allocation7 + $0x70] sm:$0xff]
    %v1002 = vld [vmem:[#allocation7 + $0x78] sm:$0xff]
    %v1003 = vld [vmem:[#allocation7 + $0x80] sm:$0xff]
    %v1004 = vld [vmem:[#allocation7 + $0x88] sm:$0xff]
    %v1005 = vld [vmem:[#allocation7 + $0x90] sm:$0xff]
    %v1006 = vld [vmem:[#allocation7 + $0x98] sm:$0xff]
    %v1007 = vld [vmem:[#allocation7 + $0xa0] sm:$0xff]
    %v1008 = vld [vmem:[#allocation7 + $0xa8] sm:$0xff]
    %v1009 = vld [vmem:[#allocation7 + $0xb0] sm:$0xff]
    %v1010 = vld [vmem:[#allocation7 + $0xb8] sm:$0xff]
    %v1011 = vld [vmem:[#allocation7 + $0xc0] sm:$0xff]
    %v1012 = vld [vmem:[#allocation7 + $0xc8] sm:$0xff]
    %v1013 = vld [vmem:[#allocation7 + $0xd0] sm:$0xff]
    %v1014 = vld [vmem:[#allocation7 + $0xd8] sm:$0xff]
    %v1015 = vld [vmem:[#allocation7 + $0xe0] sm:$0xff]
    %v1016 = vld [vmem:[#allocation7 + $0xe8] sm:$0xff]
    %v1017 = vld [vmem:[#allocation7 + $0xf0] sm:$0xff]
    %v1018 = vld [vmem:[#allocation7 + $0xf8] sm:$0xff]
    %v1019 = vld [vmem:[#allocation7 + $0x100] sm:$0xff]
    %v1020 = vld [vmem:[#allocation7 + $0x108] sm:$0xff]
    %v1021 = vld [vmem:[#allocation7 + $0x110] sm:$0xff]
    %v1022 = vld [vmem:[#allocation7 + $0x118] sm:$0xff]
    %v1023 = vld [vmem:[#allocation7 + $0x120] sm:$0xff]
    %v1024 = vld [vmem:[#allocation7 + $0x128] sm:$0xff]
    %v1025 = vld [vmem:[#allocation7 + $0x130] sm:$0xff]
    %v1026 = vld [vmem:[#allocation7 + $0x138] sm:$0xff]
    %v1027 = vld [vmem:[#allocation7 + $0x140] sm:$0xff]
    %v1028 = vld [vmem:[#allocation7 + $0x148] sm:$0xff]
    %v1029 = vld [vmem:[#allocation7 + $0x150] sm:$0xff]
    %v1030 = vld [vmem:[#allocation7 + $0x158] sm:$0xff]
    %v1031 = vld [vmem:[#allocation7 + $0x160] sm:$0xff]
    %v1032 = vld [vmem:[#allocation7 + $0x168] sm:$0xff]
    %v1033 = vld [vmem:[#allocation7 + $0x170] sm:$0xff]
    %v1034 = vld [vmem:[#allocation7 + $0x178] sm:$0xff]
    %v1035 = vld [vmem:[%s6] sm:$0x3]
    %v1037 = vlaneseq
    %v1038 = vshrl.u32 %v1037, 7
    %v1039 = vsub.s32 0, %v1038
    %v1040 = vrot.slane %v1035, %v1039
    %v1041 = vlaneseq
    %v1042 = vshrl.u32 %v1041, 7
    %v1043 = vsub.s32 1, %v1042
    %v1044 = vrot.slane %v1035, %v1043
    %v1095 = vunpack.c.l.b16 %v987
    %v1096 = vunpack.c.h.b16 %v987
    %v1097 = vunpack.c.l.b16 %v988
    %v1098 = vunpack.c.h.b16 %v988
    %v1099 = vunpack.c.l.b16 %v989
    %v1100 = vunpack.c.h.b16 %v989
    %v1101 = vunpack.c.l.b16 %v990
    %v1102 = vunpack.c.h.b16 %v990
    %v1103 = vunpack.c.l.b16 %v991
    %v1104 = vunpack.c.h.b16 %v991
    %v1105 = vunpack.c.l.b16 %v992
    %v1106 = vunpack.c.h.b16 %v992
    %v1107 = vunpack.c.l.b16 %v993
    %v1108 = vunpack.c.h.b16 %v993
    %v1109 = vunpack.c.l.b16 %v994
    %v1110 = vunpack.c.h.b16 %v994
    %v1111 = vunpack.c.l.b16 %v995
    %v1112 = vunpack.c.h.b16 %v995
    %v1113 = vunpack.c.l.b16 %v996
    %v1114 = vunpack.c.h.b16 %v996
    %v1115 = vunpack.c.l.b16 %v997
    %v1116 = vunpack.c.h.b16 %v997
    %v1117 = vunpack.c.l.b16 %v998
    %v1118 = vunpack.c.h.b16 %v998
    %v1119 = vunpack.c.l.b16 %v999
    %v1120 = vunpack.c.h.b16 %v999
    %v1121 = vunpack.c.l.b16 %v1000
    %v1122 = vunpack.c.h.b16 %v1000
    %v1123 = vunpack.c.l.b16 %v1001
    %v1124 = vunpack.c.h.b16 %v1001
    %v1125 = vunpack.c.l.b16 %v1002
    %v1126 = vunpack.c.h.b16 %v1002
    %v1127 = vunpack.c.l.b16 %v1003
    %v1128 = vunpack.c.h.b16 %v1003
    %v1129 = vunpack.c.l.b16 %v1004
    %v1130 = vunpack.c.h.b16 %v1004
    %v1131 = vunpack.c.l.b16 %v1005
    %v1132 = vunpack.c.h.b16 %v1005
    %v1133 = vunpack.c.l.b16 %v1006
    %v1134 = vunpack.c.h.b16 %v1006
    %v1135 = vunpack.c.l.b16 %v1007
    %v1136 = vunpack.c.h.b16 %v1007
    %v1137 = vunpack.c.l.b16 %v1008
    %v1138 = vunpack.c.h.b16 %v1008
    %v1139 = vunpack.c.l.b16 %v1009
    %v1140 = vunpack.c.h.b16 %v1009
    %v1141 = vunpack.c.l.b16 %v1010
    %v1142 = vunpack.c.h.b16 %v1010
    %v1143 = vunpack.c.l.b16 %v1011
    %v1144 = vunpack.c.h.b16 %v1011
    %v1145 = vunpack.c.l.b16 %v1012
    %v1146 = vunpack.c.h.b16 %v1012
    %v1147 = vunpack.c.l.b16 %v1013
    %v1148 = vunpack.c.h.b16 %v1013
    %v1149 = vunpack.c.l.b16 %v1014
    %v1150 = vunpack.c.h.b16 %v1014
    %v1151 = vunpack.c.l.b16 %v1015
    %v1152 = vunpack.c.h.b16 %v1015
    %v1153 = vunpack.c.l.b16 %v1016
    %v1154 = vunpack.c.h.b16 %v1016
    %v1155 = vunpack.c.l.b16 %v1017
    %v1156 = vunpack.c.h.b16 %v1017
    %v1157 = vunpack.c.l.b16 %v1018
    %v1158 = vunpack.c.h.b16 %v1018
    %v1159 = vunpack.c.l.b16 %v1019
    %v1160 = vunpack.c.h.b16 %v1019
    %v1161 = vunpack.c.l.b16 %v1020
    %v1162 = vunpack.c.h.b16 %v1020
    %v1163 = vunpack.c.l.b16 %v1021
    %v1164 = vunpack.c.h.b16 %v1021
    %v1165 = vunpack.c.l.b16 %v1022
    %v1166 = vunpack.c.h.b16 %v1022
    %v1167 = vunpack.c.l.b16 %v1023
    %v1168 = vunpack.c.h.b16 %v1023
    %v1169 = vunpack.c.l.b16 %v1024
    %v1170 = vunpack.c.h.b16 %v1024
    %v1171 = vunpack.c.l.b16 %v1025
    %v1172 = vunpack.c.h.b16 %v1025
    %v1173 = vunpack.c.l.b16 %v1026
    %v1174 = vunpack.c.h.b16 %v1026
    %v1175 = vunpack.c.l.b16 %v1027
    %v1176 = vunpack.c.h.b16 %v1027
    %v1177 = vunpack.c.l.b16 %v1028
    %v1178 = vunpack.c.h.b16 %v1028
    %v1179 = vunpack.c.l.b16 %v1029
    %v1180 = vunpack.c.h.b16 %v1029
    %v1181 = vunpack.c.l.b16 %v1030
    %v1182 = vunpack.c.h.b16 %v1030
    %v1183 = vunpack.c.l.b16 %v1031
    %v1184 = vunpack.c.h.b16 %v1031
    %v1185 = vunpack.c.l.b16 %v1032
    %v1186 = vunpack.c.h.b16 %v1032
    %v1187 = vunpack.c.l.b16 %v1033
    %v1188 = vunpack.c.h.b16 %v1033
    %v1189 = vunpack.c.l.b16 %v1034
    %v1190 = vunpack.c.h.b16 %v1034
    %v1191 = vpack.c.b16 %v1097, %v1095
    %v1192 = vpack.c.b16 %v1098, %v1096
    %v1193 = vpack.c.b16 %v1101, %v1099
    %v1194 = vpack.c.b16 %v1102, %v1100
    %v1195 = vpack.c.b16 %v1105, %v1103
    %v1196 = vpack.c.b16 %v1106, %v1104
    %v1197 = vpack.c.b16 %v1109, %v1107
    %v1198 = vpack.c.b16 %v1110, %v1108
    %v1199 = vpack.c.b16 %v1113, %v1111
    %v1200 = vpack.c.b16 %v1114, %v1112
    %v1201 = vpack.c.b16 %v1117, %v1115
    %v1202 = vpack.c.b16 %v1118, %v1116
    %v1203 = vpack.c.b16 %v1121, %v1119
    %v1204 = vpack.c.b16 %v1122, %v1120
    %v1205 = vpack.c.b16 %v1125, %v1123
    %v1206 = vpack.c.b16 %v1126, %v1124
    %v1207 = vpack.c.b16 %v1129, %v1127
    %v1208 = vpack.c.b16 %v1130, %v1128
    %v1209 = vpack.c.b16 %v1133, %v1131
    %v1210 = vpack.c.b16 %v1134, %v1132
    %v1211 = vpack.c.b16 %v1137, %v1135
    %v1212 = vpack.c.b16 %v1138, %v1136
    %v1213 = vpack.c.b16 %v1141, %v1139
    %v1214 = vpack.c.b16 %v1142, %v1140
    %v1215 = vpack.c.b16 %v1145, %v1143
    %v1216 = vpack.c.b16 %v1146, %v1144
    %v1217 = vpack.c.b16 %v1149, %v1147
    %v1218 = vpack.c.b16 %v1150, %v1148
    %v1219 = vpack.c.b16 %v1153, %v1151
    %v1220 = vpack.c.b16 %v1154, %v1152
    %v1221 = vpack.c.b16 %v1157, %v1155
    %v1222 = vpack.c.b16 %v1158, %v1156
    %v1223 = vpack.c.b16 %v1161, %v1159
    %v1224 = vpack.c.b16 %v1162, %v1160
    %v1225 = vpack.c.b16 %v1165, %v1163
    %v1226 = vpack.c.b16 %v1166, %v1164
    %v1227 = vpack.c.b16 %v1169, %v1167
    %v1228 = vpack.c.b16 %v1170, %v1168
    %v1229 = vpack.c.b16 %v1173, %v1171
    %v1230 = vpack.c.b16 %v1174, %v1172
    %v1231 = vpack.c.b16 %v1177, %v1175
    %v1232 = vpack.c.b16 %v1178, %v1176
    %v1233 = vpack.c.b16 %v1181, %v1179
    %v1234 = vpack.c.b16 %v1182, %v1180
    %v1235 = vpack.c.b16 %v1185, %v1183
    %v1236 = vpack.c.b16 %v1186, %v1184
    %v1237 = vpack.c.b16 %v1189, %v1187
    %v1238 = vpack.c.b16 %v1190, %v1188
    %1287 = vmatprep.subr.bf16.mxu0 %v1192
    %1288 = vmatpush1.bf16.msra.mxu0 %v1191
    %1289 = vmatprep.subr.bf16.mxu0 %v1194
    %1290 = vmatpush1.bf16.msra.mxu0 %v1193
    %1291 = vmatprep.subr.bf16.mxu0 %v1196
    %1292 = vmatpush1.bf16.msra.mxu0 %v1195
    %1293 = vmatprep.subr.bf16.mxu0 %v1198
    %1294 = vmatpush1.bf16.msra.mxu0 %v1197
    %1295 = vmatprep.subr.bf16.mxu0 %v1200
    %1296 = vmatpush1.bf16.msra.mxu0 %v1199
    %1297 = vmatprep.subr.bf16.mxu0 %v1202
    %1298 = vmatpush1.bf16.msra.mxu0 %v1201
    %1299 = vmatprep.subr.bf16.mxu0 %v1204
    %1300 = vmatpush1.bf16.msra.mxu0 %v1203
    %1301 = vmatprep.subr.bf16.mxu0 %v1206
    %1302 = vmatpush1.bf16.msra.mxu0 %v1205
    %1303 = vmatprep.subr.bf16.mxu0 %v1208
    %1304 = vmatpush1.bf16.msra.mxu0 %v1207
    %1305 = vmatprep.subr.bf16.mxu0 %v1210
    %1306 = vmatpush1.bf16.msra.mxu0 %v1209
    %1307 = vmatprep.subr.bf16.mxu0 %v1212
    %1308 = vmatpush1.bf16.msra.mxu0 %v1211
    %1309 = vmatprep.subr.bf16.mxu0 %v1214
    %1310 = vmatpush1.bf16.msra.mxu0 %v1213
    %1311 = vmatprep.subr.bf16.mxu0 %v1216
    %1312 = vmatpush1.bf16.msra.mxu0 %v1215
    %1313 = vmatprep.subr.bf16.mxu0 %v1218
    %1314 = vmatpush1.bf16.msra.mxu0 %v1217
    %1315 = vmatprep.subr.bf16.mxu0 %v1220
    %1316 = vmatpush1.bf16.msra.mxu0 %v1219
    %1317 = vmatprep.subr.bf16.mxu0 %v1222
    %1318 = vmatpush1.bf16.msra.mxu0 %v1221
    %1319 = vmatprep.mubr.bf16.mxu0 %v982
    %1320 = vmatmul.mubr.bf16.gmra.mrb[0].mxu0 %v981
    %v1321 = vpop.f32.mrb[0].mxu0
    %v1322 = vadd.f32 %v1040, %v1321
    %v1323 = vpop.f32.mrb[0].mxu0
    %v1324 = vadd.f32 %v1044, %v1323
    %v1325 = vpop.f32.mrb[0].mxu0
    %v1326 = vadd.f32 %v1040, %v1325
    %v1327 = vpop.f32.mrb[0].mxu0
    %v1328 = vadd.f32 %v1044, %v1327
    %1329 = vmatprep.mubr.bf16.mxu0 %v985
    %1330 = vmatmul.mubr.bf16.gmra.mrb[0].mxu0 %v984
    %v1331 = vpop.f32.mrb[0].mxu0
    %v1332 = vadd.f32 %v1040, %v1331
    %v1333 = vpop.f32.mrb[0].mxu0
    %v1334 = vadd.f32 %v1044, %v1333
    %v1335 = vpop.f32.mrb[0].mxu0
    %v1336 = vadd.f32 %v1040, %v1335
    %v1337 = vpop.f32.mrb[0].mxu0
    %v1338 = vadd.f32 %v1044, %v1337
    %1339 = vdwg.mxu0
    %1340 = vmatprep.subr.bf16.mxu0 %v1224
    %1341 = vmatpush1.bf16.msra.mxu0 %v1223
    %1342 = vmatprep.subr.bf16.mxu0 %v1226
    %1343 = vmatpush1.bf16.msra.mxu0 %v1225
    %1344 = vmatprep.subr.bf16.mxu0 %v1228
    %1345 = vmatpush1.bf16.msra.mxu0 %v1227
    %1346 = vmatprep.subr.bf16.mxu0 %v1230
    %1347 = vmatpush1.bf16.msra.mxu0 %v1229
    %1348 = vmatprep.subr.bf16.mxu0 %v1232
    %1349 = vmatpush1.bf16.msra.mxu0 %v1231
    %1350 = vmatprep.subr.bf16.mxu0 %v1234
    %1351 = vmatpush1.bf16.msra.mxu0 %v1233
    %1352 = vmatprep.subr.bf16.mxu0 %v1236
    %1353 = vmatpush1.bf16.msra.mxu0 %v1235
    %1354 = vmatprep.subr.bf16.mxu0 %v1238
    %1355 = vmatpush1.bf16.msra.mxu0 %v1237
    %1356 = vmatprep.subr.bf16.mxu0 0
    %1357 = vmatpush1.bf16.msra.mxu0 0
    %1358 = vmatprep.subr.bf16.mxu0 0
    %1359 = vmatpush1.bf16.msra.mxu0 0
    %1360 = vmatprep.subr.bf16.mxu0 0
    %1361 = vmatpush1.bf16.msra.mxu0 0
    %1362 = vmatprep.subr.bf16.mxu0 0
    %1363 = vmatpush1.bf16.msra.mxu0 0
    %1364 = vmatprep.subr.bf16.mxu0 0
    %1365 = vmatpush1.bf16.msra.mxu0 0
    %1366 = vmatprep.subr.bf16.mxu0 0
    %1367 = vmatpush1.bf16.msra.mxu0 0
    %1368 = vmatprep.subr.bf16.mxu0 0
    %1369 = vmatpush1.bf16.msra.mxu0 0
    %1370 = vmatprep.subr.bf16.mxu0 0
    %1371 = vmatpush1.bf16.msra.mxu0 0
    %1372 = vmatprep.mubr.bf16.mxu0 0
    %1373 = vmatmul.mubr.bf16.gmra.mrb[0].mxu0 %v983
    %v1374 = vpop.f32.mrb[0].mxu0
    %v1375 = vadd.f32 %v1322, %v1374
    %v1376 = vpop.f32.mrb[0].mxu0
    %v1377 = vadd.f32 %v1324, %v1376
    %v1378 = vpop.f32.mrb[0].mxu0
    %v1379 = vadd.f32 %v1326, %v1378
    %v1380 = vpop.f32.mrb[0].mxu0
    %v1381 = vadd.f32 %v1328, %v1380
    %1382 = vmatprep.mubr.bf16.mxu0 0
    %1383 = vmatmul.mubr.bf16.gmra.mrb[0].mxu0 %v986
    %v1384 = vpop.f32.mrb[0].mxu0
    %v1385 = vadd.f32 %v1332, %v1384
    %v1386 = vpop.f32.mrb[0].mxu0
    %v1387 = vadd.f32 %v1334, %v1386
    %v1388 = vpop.f32.mrb[0].mxu0
    %v1389 = vadd.f32 %v1336, %v1388
    %v1390 = vpop.f32.mrb[0].mxu0
    %v1391 = vadd.f32 %v1338, %v1390
    %1392 = vdwg.mxu0
    %v1393 = vmax.f32 %v1375, 0.0
    %v1394 = vmax.f32 %v1377, 0.0
    %v1395 = vmax.f32 %v1379, 0.0
    %v1396 = vmax.f32 %v1381, 0.0
    %v1397 = vmax.f32 %v1385, 0.0
    %v1398 = vmax.f32 %v1387, 0.0
    %v1399 = vmax.f32 %v1389, 0.0
    %v1400 = vmax.f32 %v1391, 0.0
    %1401 = vst [vmem:[#allocation8] sm:$0xff] %v1393
    %1402 = vst [vmem:[#allocation8 + $0x8] sm:$0xff] %v1394
    %1403 = vst [vmem:[#allocation8 + $0x10] sm:$0xff] %v1395
    %1404 = vst [vmem:[#allocation8 + $0x18] sm:$0xff] %v1396
    %1405 = vst [vmem:[#allocation8 + $0x20] sm:$0xff] %v1397
    %1406 = vst [vmem:[#allocation8 + $0x28] sm:$0xff] %v1398
    %1407 = vst [vmem:[#allocation8 + $0x30] sm:$0xff] %v1399
    %1408 = vst [vmem:[#allocation8 + $0x38] sm:$0xff] %v1400
    // Predicated region
    $region42: #{tpu_custom_call.1} parent=1 // pred_check
      _
    $region43: #{tpu_custom_call.1} parent=1 // pred_check_branch
      %1410 = sbr.rel (0) target = $region45
    $region44: #{tpu_custom_call.1} parent=1 // pred_region
      %s1412 = ssub.s32 1024, 1024
      %1413 = vsyncadd [#allocation4], %s1412
      %s1414 = sshll.u32 [#allocation8], 4
      %s1415 = int_to_ptr.vmem [resolvable:$true] %s1414
      %1420 = dma.vmem_to_hbm [thread:$0]  %s1415, 1024, %s7, [#allocation4], 256, 256, 16
    $region45: #{tpu_custom_call.1} parent=1 // pred_fallthru
      _
    // Predicated region
    $region46: #{tpu_custom_call.1} parent=1 // pred_check
      _
    $region47: #{tpu_custom_call.1} parent=1 // pred_check_branch
      %1422 = sbr.rel (0) target = $region49
    $region48: #{tpu_custom_call.1} parent=1 // pred_region
      %1423 = dma.done [#allocation4], 1024
    $region49: #{tpu_custom_call.1} parent=1 // pred_fallthru
      _
    %1424 = vsyncpa [#allocation3], 1
    %1425 = vsyncpa [#allocation6], 1
    %1426 = vsyncpa [#allocation4], 1

</llo_original>
